<compile_context>
chip_gen: v7x
topology: tpu7x:2x2x1
jax: 0.10.0
libtpu: 0.0.40
codegen_flags: <defaults>
</compile_context>

<pallas_src>
import jax
import jax.numpy as jnp
from jax import lax
from jax.experimental import pallas as pl
from jax.experimental.pallas import tpu as pltpu

EPS = 1e-5


# ------------------------------ glue helpers --------------------------------
def _upsample_nearest(x, s):
    # NCDHW nearest-neighbour upsample == PyTorch nn.Upsample(scale_factor=s).
    for ax in (2, 3, 4):
        x = jnp.repeat(x, s, axis=ax)
    return x


# ----------------------------- Pallas kernel --------------------------------
def _make_kernel(Cin, Cout, K, TM, tap_offsets):
    def kernel(x_ref, wt_ref, scale_ref, shift_ref, o_ref, xwin_ref, xcol_ref):
        # x_ref    : (n_tiles, Cin, TM) bf16  guarded, flattened, TM-tiled volume
        # wt_ref   : (Cout, K)          bf16  w^T, K = 27*Cin (tap-major, ci-minor)
        # scale_ref: (Cout, 1)          f32   folded BN scale
        # shift_ref: (Cout, 1)          f32   folded conv-bias + BN shift
        # o_ref    : (Cout, TM)         f32   one output tile (channel-first)
        # xwin_ref : (Cin, 3*TM)        bf16  scratch: current tile +/- one-tile halo
        # xcol_ref : (K, TM)            bf16  scratch: im2col^T for this tile
        qi = pl.program_id(1)

        # Window = tiles [qi, qi+1, qi+2] of the guarded flat volume
        # (pre-guard of the flat array is exactly one tile, so tile qi+1 holds
        #  the output positions of this grid step).
        xwin_ref[:, 0 * TM:1 * TM] = x_ref[qi]
        xwin_ref[:, 1 * TM:2 * TM] = x_ref[qi + 1]
        xwin_ref[:, 2 * TM:3 * TM] = x_ref[qi + 2]

        # VMEM->VMEM gather of the 27 shifted 3x3x3 taps (static offsets only).
        for t, off in enumerate(tap_offsets):
            s = TM + off
            xcol_ref[t * Cin:(t + 1) * Cin, :] = xwin_ref[:, s:s + TM]

        # Single transposed GEMM on the MXU: (Cout, K) x (K, TM) -> (Cout, TM),
        # bf16 operands, f32 accumulation.
        acc = jnp.dot(wt_ref[...], xcol_ref[...],
                      preferred_element_type=jnp.float32)

        # Folded BatchNorm (eval) + conv bias, then ReLU, in f32.
        y = acc * scale_ref[...] + shift_ref[...]
        o_ref[...] = jnp.maximum(y, 0.0).astype(o_ref.dtype)

    return kernel


# ------------------------------ host wrapper --------------------------------
def up_conv_forward(x, params, *, scale_factor=2, tm=512):
    """x: (N, Cin, D0, H0, W0) f32 NCDHW.  Returns (N, Cout, D, H, W) f32."""
    w, b, gamma, beta, mean, var = params          # w: (3,3,3,Cin,Cout) DHWIO
    N, Cin = x.shape[:2]
    Cout = w.shape[-1]

    xu = _upsample_nearest(x, scale_factor)        # (N, Cin, D, H, W)
    D, H, W = xu.shape[2:]
    Dp, Hp, Wp = D + 2, H + 2, W + 2
    Mp = Dp * Hp * Wp                              # padded flat volume size
    K = 27 * Cin

    gmax = Hp * Wp + Wp + 1                        # max |tap offset| in flat coords
    assert tm % 128 == 0 and tm >= gmax, (tm, gmax)

    n_q = (Mp + tm - 1) // tm                      # output tiles per batch element
    n_tiles = n_q + 2                              # + one guard tile on each side
    m_pad = n_q * tm
    gtot = n_tiles * tm

    # Glue (pure data movement, no 27x blow-up): pad, flatten, guard, tile.
    xp = jnp.pad(xu, ((0, 0), (0, 0), (1, 1), (1, 1), (1, 1)))
    xf = xp.reshape(N, Cin, Mp)
    xg = jnp.pad(xf, ((0, 0), (0, 0), (tm, gtot - tm - Mp)))   # pre-guard = 1 tile
    x_tiles = xg.reshape(N, Cin, n_tiles, tm).transpose(0, 2, 1, 3)
    x_tiles = x_tiles.astype(jnp.bfloat16)         # (N, n_tiles, Cin, TM)

    # Tap offsets in the flattened padded volume (tap-major order kd, kh, kw),
    # matching the weight flattening below.
    tap_offsets = tuple((kd - 1) * Hp * Wp + (kh - 1) * Wp + (kw - 1)
                        for kd in range(3) for kh in range(3) for kw in range(3))

    wt = w.reshape(K, Cout).T.astype(jnp.bfloat16)             # (Cout, K)
    bn_scale = gamma / jnp.sqrt(var + EPS)                     # fold BN (eval) + bias
    bn_shift = (b - mean) * bn_scale + beta
    bn_scale = bn_scale.reshape(Cout, 1).astype(jnp.float32)
    bn_shift = bn_shift.reshape(Cout, 1).astype(jnp.float32)

    kernel = _make_kernel(Cin, Cout, K, tm, tap_offsets)

    cost = pl.CostEstimate(
        flops=2 * N * m_pad * K * Cout,
        transcendentals=0,
        bytes_accessed=(x_tiles.size * 2 + wt.size * 2
                        + N * Cout * m_pad * 4 + 2 * Cout * 4))

    out_flat = pl.pallas_call(
        kernel,
        out_shape=jax.ShapeDtypeStruct((N, Cout, m_pad), jnp.float32),
        grid=(N, n_q),
        in_specs=[
            # whole guarded flat volume per batch element (only re-DMA'd when n
            # changes); TODO(synk): window + manual DMA at production sizes.
            pl.BlockSpec((None, n_tiles, Cin, tm), lambda n, qi: (n, 0, 0, 0)),
            pl.BlockSpec((Cout, K), lambda n, qi: (0, 0)),
            pl.BlockSpec((Cout, 1), lambda n, qi: (0, 0)),
            pl.BlockSpec((Cout, 1), lambda n, qi: (0, 0)),
        ],
        out_specs=pl.BlockSpec((None, Cout, tm), lambda n, qi: (n, 0, qi)),
        scratch_shapes=[
            pltpu.VMEM((Cin, 3 * tm), jnp.bfloat16),   # halo window
            pltpu.VMEM((K, tm), jnp.bfloat16),         # im2col^T tile
        ],
        compiler_params=pltpu.CompilerParams(
            dimension_semantics=("parallel", "parallel"),
            vmem_limit_bytes=32 * 1024 * 1024),
        cost_estimate=cost,
    )(x_tiles, wt, bn_scale, bn_shift)

    # Trim the over-computed padded-border / tail positions and un-flatten.
    out = out_flat[:, :, :Mp].reshape(N, Cout, Dp, Hp, Wp)
    return out[:, :, 1:-1, 1:-1, 1:-1]             # (N, Cout, D, H, W) NCDHW


# --------------------------- pure-JAX reference -----------------------------
def up_conv_reference(x, params, scale_factor=2):
    w, b, gamma, beta, mean, var = params
    xu = _upsample_nearest(x, scale_factor)
    y = lax.conv_general_dilated(
        xu, w, window_strides=(1, 1, 1),
        padding=((1, 1), (1, 1), (1, 1)),
        dimension_numbers=('NCDHW', 'DHWIO', 'NCDHW'))
    c = (1, -1, 1, 1, 1)
    y = y + b.reshape(c)
    y = (y - mean.reshape(c)) / jnp.sqrt(var.reshape(c) + EPS) \
        * gamma.reshape(c) + beta.reshape(c)
    return jnp.maximum(y, 0.0)


# --------------------------------- main --------------------------------------
if __name__ == "__main__":
    key = jax.random.PRNGKey(0)
    k_x, kw_, kb, kg, kbt, km, kv = jax.random.split(key, 7)

    N, CH_IN, CH_OUT = 2, 4, 32
    D0 = H0 = W0 = 8                         # upsampled to 16^3 by the module
    x = jax.random.normal(k_x, (N, CH_IN, D0, H0, W0), jnp.float32)  # NCDHW

    w = 0.1 * jax.random.normal(kw_, (3, 3, 3, CH_IN, CH_OUT), jnp.float32)
    b = 0.1 * jax.random.normal(kb, (CH_OUT,), jnp.float32)
    gamma = jax.random.uniform(kg, (CH_OUT,), jnp.float32, 0.5, 1.5)
    beta = 0.1 * jax.random.normal(kbt, (CH_OUT,), jnp.float32)
    mean = 0.1 * jax.random.normal(km, (CH_OUT,), jnp.float32)
    var = jax.random.uniform(kv, (CH_OUT,), jnp.float32, 0.5, 1.5)
    params = (w, b, gamma, beta, mean, var)

    out = jax.block_until_ready(up_conv_forward(x, params))
    ref = jax.block_until_ready(up_conv_reference(x, params))

    assert out.shape == (N, CH_OUT, 2 * D0, 2 * H0, 2 * W0), out.shape
    max_err = float(jnp.max(jnp.abs(out - ref)))
    # bf16 GEMM operands with f32 accumulation vs pure-f32 reference.
    assert max_err < 5e-2, f"mismatch vs reference: {max_err}"

    print("KERNEL_OK")
</pallas_src>

<mosaic_0001>
module attributes {stable_mosaic.version = 11 : i64} {
  func.func @kernel(%arg0: i32, %arg1: i32, %arg2: memref<1x14x4x512xbf16, #tpu.memory_space<vmem>>, %arg3: memref<32x108xbf16, #tpu.memory_space<vmem>>, %arg4: memref<32x1xf32, #tpu.memory_space<vmem>>, %arg5: memref<32x1xf32, #tpu.memory_space<vmem>>, %arg6: memref<1x32x512xf32, #tpu.memory_space<vmem>>, %arg7: memref<4x1536xbf16, #tpu.memory_space<vmem>>, %arg8: memref<108x512xbf16, #tpu.memory_space<vmem>>) attributes {dimension_semantics = [#tpu.dimension_semantics<parallel>, #tpu.dimension_semantics<parallel>], iteration_bounds = array<i64: 2, 12>, scalar_prefetch = 0 : i64, scratch_operands = 2 : i64, tpu.core_type = #tpu.core_type<tc>, window_params = [{transform_indices = @transform_0, window_bounds = array<i64: 1, 14, 4, 512>}, {pipeline_mode = #tpu.pipeline_mode<synchronous>, transform_indices = @transform_1, window_bounds = array<i64: 32, 108>}, {pipeline_mode = #tpu.pipeline_mode<synchronous>, transform_indices = @transform_2, window_bounds = array<i64: 32, 1>}, {pipeline_mode = #tpu.pipeline_mode<synchronous>, transform_indices = @transform_3, window_bounds = array<i64: 32, 1>}, {transform_indices = @transform_4, window_bounds = array<i64: 1, 32, 512>}]} {
    %c0 = arith.constant 0 : index
    %0 = arith.index_cast %arg1 : i32 to index
    %c0_0 = arith.constant 0 : index
    %c0_1 = arith.constant 0 : index
    %1 = vector.load %arg2[%c0, %0, %c0_0, %c0_1] : memref<1x14x4x512xbf16, #tpu.memory_space<vmem>>, vector<1x1x4x512xbf16>
    %2 = vector.shape_cast %1 : vector<1x1x4x512xbf16> to vector<4x512xbf16>
    %c0_2 = arith.constant 0 : index
    %c0_3 = arith.constant 0 : index
    %3 = vector.load %arg7[%c0_2, %c0_3] : memref<4x1536xbf16, #tpu.memory_space<vmem>>, vector<4x512xbf16>
    tpu.vector_store %arg7[%c0_2, %c0_3], %2 {strides = array<i32>} : memref<4x1536xbf16, #tpu.memory_space<vmem>>, vector<4x512xbf16>,
    %c1_i32 = arith.constant 1 : i32
    %4 = arith.addi %arg1, %c1_i32 : i32
    %c0_4 = arith.constant 0 : index
    %5 = arith.index_cast %4 : i32 to index
    %c0_5 = arith.constant 0 : index
    %c0_6 = arith.constant 0 : index
    %6 = vector.load %arg2[%c0_4, %5, %c0_5, %c0_6] : memref<1x14x4x512xbf16, #tpu.memory_space<vmem>>, vector<1x1x4x512xbf16>
    %7 = vector.shape_cast %6 : vector<1x1x4x512xbf16> to vector<4x512xbf16>
    %c0_7 = arith.constant 0 : index
    %c512 = arith.constant 512 : index
    %8 = vector.load %arg7[%c0_7, %c512] : memref<4x1536xbf16, #tpu.memory_space<vmem>>, vector<4x512xbf16>
    tpu.vector_store %arg7[%c0_7, %c512], %7 {strides = array<i32>} : memref<4x1536xbf16, #tpu.memory_space<vmem>>, vector<4x512xbf16>,
    %c2_i32 = arith.constant 2 : i32
    %9 = arith.addi %arg1, %c2_i32 : i32
    %c0_8 = arith.constant 0 : index
    %10 = arith.index_cast %9 : i32 to index
    %c0_9 = arith.constant 0 : index
    %c0_10 = arith.constant 0 : index
    %11 = vector.load %arg2[%c0_8, %10, %c0_9, %c0_10] : memref<1x14x4x512xbf16, #tpu.memory_space<vmem>>, vector<1x1x4x512xbf16>
    %12 = vector.shape_cast %11 : vector<1x1x4x512xbf16> to vector<4x512xbf16>
    %c0_11 = arith.constant 0 : index
    %c1024 = arith.constant 1024 : index
    %13 = vector.load %arg7[%c0_11, %c1024] : memref<4x1536xbf16, #tpu.memory_space<vmem>>, vector<4x512xbf16>
    tpu.vector_store %arg7[%c0_11, %c1024], %12 {strides = array<i32>} : memref<4x1536xbf16, #tpu.memory_space<vmem>>, vector<4x512xbf16>,
    %c0_12 = arith.constant 0 : index
    %c169 = arith.constant 169 : index
    %14 = vector.load %arg7[%c0_12, %c169] : memref<4x1536xbf16, #tpu.memory_space<vmem>>, vector<4x512xbf16>
    %c0_13 = arith.constant 0 : index
    %c0_14 = arith.constant 0 : index
    %15 = vector.load %arg8[%c0_13, %c0_14] : memref<108x512xbf16, #tpu.memory_space<vmem>>, vector<4x512xbf16>
    tpu.vector_store %arg8[%c0_13, %c0_14], %14 {strides = array<i32>} : memref<108x512xbf16, #tpu.memory_space<vmem>>, vector<4x512xbf16>,
    %c0_15 = arith.constant 0 : index
    %c170 = arith.constant 170 : index
    %16 = vector.load %arg7[%c0_15, %c170] : memref<4x1536xbf16, #tpu.memory_space<vmem>>, vector<4x512xbf16>
    %c4 = arith.constant 4 : index
    %c0_16 = arith.constant 0 : index
    %17 = vector.load %arg8[%c4, %c0_16] : memref<108x512xbf16, #tpu.memory_space<vmem>>, vector<4x512xbf16>
    tpu.vector_store %arg8[%c4, %c0_16], %16 {strides = array<i32>} : memref<108x512xbf16, #tpu.memory_space<vmem>>, vector<4x512xbf16>,
    %c0_17 = arith.constant 0 : index
    %c171 = arith.constant 171 : index
    %18 = vector.load %arg7[%c0_17, %c171] : memref<4x1536xbf16, #tpu.memory_space<vmem>>, vector<4x512xbf16>
    %c8 = arith.constant 8 : index
    %c0_18 = arith.constant 0 : index
    %19 = vector.load %arg8[%c8, %c0_18] : memref<108x512xbf16, #tpu.memory_space<vmem>>, vector<4x512xbf16>
    tpu.vector_store %arg8[%c8, %c0_18], %18 {strides = array<i32>} : memref<108x512xbf16, #tpu.memory_space<vmem>>, vector<4x512xbf16>,
    %c0_19 = arith.constant 0 : index
    %c187 = arith.constant 187 : index
    %20 = vector.load %arg7[%c0_19, %c187] : memref<4x1536xbf16, #tpu.memory_space<vmem>>, vector<4x512xbf16>
    %c12 = arith.constant 12 : index
    %c0_20 = arith.constant 0 : index
    %21 = vector.load %arg8[%c12, %c0_20] : memref<108x512xbf16, #tpu.memory_space<vmem>>, vector<4x512xbf16>
    tpu.vector_store %arg8[%c12, %c0_20], %20 {strides = array<i32>} : memref<108x512xbf16, #tpu.memory_space<vmem>>, vector<4x512xbf16>,
    %c0_21 = arith.constant 0 : index
    %c188 = arith.constant 188 : index
    %22 = vector.load %arg7[%c0_21, %c188] : memref<4x1536xbf16, #tpu.memory_space<vmem>>, vector<4x512xbf16>
    %c16 = arith.constant 16 : index
    %c0_22 = arith.constant 0 : index
    %23 = vector.load %arg8[%c16, %c0_22] : memref<108x512xbf16, #tpu.memory_space<vmem>>, vector<4x512xbf16>
    tpu.vector_store %arg8[%c16, %c0_22], %22 {strides = array<i32>} : memref<108x512xbf16, #tpu.memory_space<vmem>>, vector<4x512xbf16>,
    %c0_23 = arith.constant 0 : index
    %c189 = arith.constant 189 : index
    %24 = vector.load %arg7[%c0_23, %c189] : memref<4x1536xbf16, #tpu.memory_space<vmem>>, vector<4x512xbf16>
    %c20 = arith.constant 20 : index
    %c0_24 = arith.constant 0 : index
    %25 = vector.load %arg8[%c20, %c0_24] : memref<108x512xbf16, #tpu.memory_space<vmem>>, vector<4x512xbf16>
    tpu.vector_store %arg8[%c20, %c0_24], %24 {strides = array<i32>} : memref<108x512xbf16, #tpu.memory_space<vmem>>, vector<4x512xbf16>,
    %c0_25 = arith.constant 0 : index
    %c205 = arith.constant 205 : index
    %26 = vector.load %arg7[%c0_25, %c205] : memref<4x1536xbf16, #tpu.memory_space<vmem>>, vector<4x512xbf16>
    %c24 = arith.constant 24 : index
    %c0_26 = arith.constant 0 : index
    %27 = vector.load %arg8[%c24, %c0_26] : memref<108x512xbf16, #tpu.memory_space<vmem>>, vector<4x512xbf16>
    tpu.vector_store %arg8[%c24, %c0_26], %26 {strides = array<i32>} : memref<108x512xbf16, #tpu.memory_space<vmem>>, vector<4x512xbf16>,
    %c0_27 = arith.constant 0 : index
    %c206 = arith.constant 206 : index
    %28 = vector.load %arg7[%c0_27, %c206] : memref<4x1536xbf16, #tpu.memory_space<vmem>>, vector<4x512xbf16>
    %c28 = arith.constant 28 : index
    %c0_28 = arith.constant 0 : index
    %29 = vector.load %arg8[%c28, %c0_28] : memref<108x512xbf16, #tpu.memory_space<vmem>>, vector<4x512xbf16>
    tpu.vector_store %arg8[%c28, %c0_28], %28 {strides = array<i32>} : memref<108x512xbf16, #tpu.memory_space<vmem>>, vector<4x512xbf16>,
    %c0_29 = arith.constant 0 : index
    %c207 = arith.constant 207 : index
    %30 = vector.load %arg7[%c0_29, %c207] : memref<4x1536xbf16, #tpu.memory_space<vmem>>, vector<4x512xbf16>
    %c32 = arith.constant 32 : index
    %c0_30 = arith.constant 0 : index
    %31 = vector.load %arg8[%c32, %c0_30] : memref<108x512xbf16, #tpu.memory_space<vmem>>, vector<4x512xbf16>
    tpu.vector_store %arg8[%c32, %c0_30], %30 {strides = array<i32>} : memref<108x512xbf16, #tpu.memory_space<vmem>>, vector<4x512xbf16>,
    %c0_31 = arith.constant 0 : index
    %c493 = arith.constant 493 : index
    %32 = vector.load %arg7[%c0_31, %c493] : memref<4x1536xbf16, #tpu.memory_space<vmem>>, vector<4x512xbf16>
    %c36 = arith.constant 36 : index
    %c0_32 = arith.constant 0 : index
    %33 = vector.load %arg8[%c36, %c0_32] : memref<108x512xbf16, #tpu.memory_space<vmem>>, vector<4x512xbf16>
    tpu.vector_store %arg8[%c36, %c0_32], %32 {strides = array<i32>} : memref<108x512xbf16, #tpu.memory_space<vmem>>, vector<4x512xbf16>,
    %c0_33 = arith.constant 0 : index
    %c494 = arith.constant 494 : index
    %34 = vector.load %arg7[%c0_33, %c494] : memref<4x1536xbf16, #tpu.memory_space<vmem>>, vector<4x512xbf16>
    %c40 = arith.constant 40 : index
    %c0_34 = arith.constant 0 : index
    %35 = vector.load %arg8[%c40, %c0_34] : memref<108x512xbf16, #tpu.memory_space<vmem>>, vector<4x512xbf16>
    tpu.vector_store %arg8[%c40, %c0_34], %34 {strides = array<i32>} : memref<108x512xbf16, #tpu.memory_space<vmem>>, vector<4x512xbf16>,
    %c0_35 = arith.constant 0 : index
    %c495 = arith.constant 495 : index
    %36 = vector.load %arg7[%c0_35, %c495] : memref<4x1536xbf16, #tpu.memory_space<vmem>>, vector<4x512xbf16>
    %c44 = arith.constant 44 : index
    %c0_36 = arith.constant 0 : index
    %37 = vector.load %arg8[%c44, %c0_36] : memref<108x512xbf16, #tpu.memory_space<vmem>>, vector<4x512xbf16>
    tpu.vector_store %arg8[%c44, %c0_36], %36 {strides = array<i32>} : memref<108x512xbf16, #tpu.memory_space<vmem>>, vector<4x512xbf16>,
    %c0_37 = arith.constant 0 : index
    %c511 = arith.constant 511 : index
    %38 = vector.load %arg7[%c0_37, %c511] : memref<4x1536xbf16, #tpu.memory_space<vmem>>, vector<4x512xbf16>
    %c48 = arith.constant 48 : index
    %c0_38 = arith.constant 0 : index
    %39 = vector.load %arg8[%c48, %c0_38] : memref<108x512xbf16, #tpu.memory_space<vmem>>, vector<4x512xbf16>
    tpu.vector_store %arg8[%c48, %c0_38], %38 {strides = array<i32>} : memref<108x512xbf16, #tpu.memory_space<vmem>>, vector<4x512xbf16>,
    %c0_39 = arith.constant 0 : index
    %c512_40 = arith.constant 512 : index
    %40 = vector.load %arg7[%c0_39, %c512_40] : memref<4x1536xbf16, #tpu.memory_space<vmem>>, vector<4x512xbf16>
    %c52 = arith.constant 52 : index
    %c0_41 = arith.constant 0 : index
    %41 = vector.load %arg8[%c52, %c0_41] : memref<108x512xbf16, #tpu.memory_space<vmem>>, vector<4x512xbf16>
    tpu.vector_store %arg8[%c52, %c0_41], %40 {strides = array<i32>} : memref<108x512xbf16, #tpu.memory_space<vmem>>, vector<4x512xbf16>,
    %c0_42 = arith.constant 0 : index
    %c513 = arith.constant 513 : index
    %42 = vector.load %arg7[%c0_42, %c513] : memref<4x1536xbf16, #tpu.memory_space<vmem>>, vector<4x512xbf16>
    %c56 = arith.constant 56 : index
    %c0_43 = arith.constant 0 : index
    %43 = vector.load %arg8[%c56, %c0_43] : memref<108x512xbf16, #tpu.memory_space<vmem>>, vector<4x512xbf16>
    tpu.vector_store %arg8[%c56, %c0_43], %42 {strides = array<i32>} : memref<108x512xbf16, #tpu.memory_space<vmem>>, vector<4x512xbf16>,
    %c0_44 = arith.constant 0 : index
    %c529 = arith.constant 529 : index
    %44 = vector.load %arg7[%c0_44, %c529] : memref<4x1536xbf16, #tpu.memory_space<vmem>>, vector<4x512xbf16>
    %c60 = arith.constant 60 : index
    %c0_45 = arith.constant 0 : index
    %45 = vector.load %arg8[%c60, %c0_45] : memref<108x512xbf16, #tpu.memory_space<vmem>>, vector<4x512xbf16>
    tpu.vector_store %arg8[%c60, %c0_45], %44 {strides = array<i32>} : memref<108x512xbf16, #tpu.memory_space<vmem>>, vector<4x512xbf16>,
    %c0_46 = arith.constant 0 : index
    %c530 = arith.constant 530 : index
    %46 = vector.load %arg7[%c0_46, %c530] : memref<4x1536xbf16, #tpu.memory_space<vmem>>, vector<4x512xbf16>
    %c64 = arith.constant 64 : index
    %c0_47 = arith.constant 0 : index
    %47 = vector.load %arg8[%c64, %c0_47] : memref<108x512xbf16, #tpu.memory_space<vmem>>, vector<4x512xbf16>
    tpu.vector_store %arg8[%c64, %c0_47], %46 {strides = array<i32>} : memref<108x512xbf16, #tpu.memory_space<vmem>>, vector<4x512xbf16>,
    %c0_48 = arith.constant 0 : index
    %c531 = arith.constant 531 : index
    %48 = vector.load %arg7[%c0_48, %c531] : memref<4x1536xbf16, #tpu.memory_space<vmem>>, vector<4x512xbf16>
    %c68 = arith.constant 68 : index
    %c0_49 = arith.constant 0 : index
    %49 = vector.load %arg8[%c68, %c0_49] : memref<108x512xbf16, #tpu.memory_space<vmem>>, vector<4x512xbf16>
    tpu.vector_store %arg8[%c68, %c0_49], %48 {strides = array<i32>} : memref<108x512xbf16, #tpu.memory_space<vmem>>, vector<4x512xbf16>,
    %c0_50 = arith.constant 0 : index
    %c817 = arith.constant 817 : index
    %50 = vector.load %arg7[%c0_50, %c817] : memref<4x1536xbf16, #tpu.memory_space<vmem>>, vector<4x512xbf16>
    %c72 = arith.constant 72 : index
    %c0_51 = arith.constant 0 : index
    %51 = vector.load %arg8[%c72, %c0_51] : memref<108x512xbf16, #tpu.memory_space<vmem>>, vector<4x512xbf16>
    tpu.vector_store %arg8[%c72, %c0_51], %50 {strides = array<i32>} : memref<108x512xbf16, #tpu.memory_space<vmem>>, vector<4x512xbf16>,
    %c0_52 = arith.constant 0 : index
    %c818 = arith.constant 818 : index
    %52 = vector.load %arg7[%c0_52, %c818] : memref<4x1536xbf16, #tpu.memory_space<vmem>>, vector<4x512xbf16>
    %c76 = arith.constant 76 : index
    %c0_53 = arith.constant 0 : index
    %53 = vector.load %arg8[%c76, %c0_53] : memref<108x512xbf16, #tpu.memory_space<vmem>>, vector<4x512xbf16>
    tpu.vector_store %arg8[%c76, %c0_53], %52 {strides = array<i32>} : memref<108x512xbf16, #tpu.memory_space<vmem>>, vector<4x512xbf16>,
    %c0_54 = arith.constant 0 : index
    %c819 = arith.constant 819 : index
    %54 = vector.load %arg7[%c0_54, %c819] : memref<4x1536xbf16, #tpu.memory_space<vmem>>, vector<4x512xbf16>
    %c80 = arith.constant 80 : index
    %c0_55 = arith.constant 0 : index
    %55 = vector.load %arg8[%c80, %c0_55] : memref<108x512xbf16, #tpu.memory_space<vmem>>, vector<4x512xbf16>
    tpu.vector_store %arg8[%c80, %c0_55], %54 {strides = array<i32>} : memref<108x512xbf16, #tpu.memory_space<vmem>>, vector<4x512xbf16>,
    %c0_56 = arith.constant 0 : index
    %c835 = arith.constant 835 : index
    %56 = vector.load %arg7[%c0_56, %c835] : memref<4x1536xbf16, #tpu.memory_space<vmem>>, vector<4x512xbf16>
    %c84 = arith.constant 84 : index
    %c0_57 = arith.constant 0 : index
    %57 = vector.load %arg8[%c84, %c0_57] : memref<108x512xbf16, #tpu.memory_space<vmem>>, vector<4x512xbf16>
    tpu.vector_store %arg8[%c84, %c0_57], %56 {strides = array<i32>} : memref<108x512xbf16, #tpu.memory_space<vmem>>, vector<4x512xbf16>,
    %c0_58 = arith.constant 0 : index
    %c836 = arith.constant 836 : index
    %58 = vector.load %arg7[%c0_58, %c836] : memref<4x1536xbf16, #tpu.memory_space<vmem>>, vector<4x512xbf16>
    %c88 = arith.constant 88 : index
    %c0_59 = arith.constant 0 : index
    %59 = vector.load %arg8[%c88, %c0_59] : memref<108x512xbf16, #tpu.memory_space<vmem>>, vector<4x512xbf16>
    tpu.vector_store %arg8[%c88, %c0_59], %58 {strides = array<i32>} : memref<108x512xbf16, #tpu.memory_space<vmem>>, vector<4x512xbf16>,
    %c0_60 = arith.constant 0 : index
    %c837 = arith.constant 837 : index
    %60 = vector.load %arg7[%c0_60, %c837] : memref<4x1536xbf16, #tpu.memory_space<vmem>>, vector<4x512xbf16>
    %c92 = arith.constant 92 : index
    %c0_61 = arith.constant 0 : index
    %61 = vector.load %arg8[%c92, %c0_61] : memref<108x512xbf16, #tpu.memory_space<vmem>>, vector<4x512xbf16>
    tpu.vector_store %arg8[%c92, %c0_61], %60 {strides = array<i32>} : memref<108x512xbf16, #tpu.memory_space<vmem>>, vector<4x512xbf16>,
    %c0_62 = arith.constant 0 : index
    %c853 = arith.constant 853 : index
    %62 = vector.load %arg7[%c0_62, %c853] : memref<4x1536xbf16, #tpu.memory_space<vmem>>, vector<4x512xbf16>
    %c96 = arith.constant 96 : index
    %c0_63 = arith.constant 0 : index
    %63 = vector.load %arg8[%c96, %c0_63] : memref<108x512xbf16, #tpu.memory_space<vmem>>, vector<4x512xbf16>
    tpu.vector_store %arg8[%c96, %c0_63], %62 {strides = array<i32>} : memref<108x512xbf16, #tpu.memory_space<vmem>>, vector<4x512xbf16>,
    %c0_64 = arith.constant 0 : index
    %c854 = arith.constant 854 : index
    %64 = vector.load %arg7[%c0_64, %c854] : memref<4x1536xbf16, #tpu.memory_space<vmem>>, vector<4x512xbf16>
    %c100 = arith.constant 100 : index
    %c0_65 = arith.constant 0 : index
    %65 = vector.load %arg8[%c100, %c0_65] : memref<108x512xbf16, #tpu.memory_space<vmem>>, vector<4x512xbf16>
    tpu.vector_store %arg8[%c100, %c0_65], %64 {strides = array<i32>} : memref<108x512xbf16, #tpu.memory_space<vmem>>, vector<4x512xbf16>,
    %c0_66 = arith.constant 0 : index
    %c855 = arith.constant 855 : index
    %66 = vector.load %arg7[%c0_66, %c855] : memref<4x1536xbf16, #tpu.memory_space<vmem>>, vector<4x512xbf16>
    %c104 = arith.constant 104 : index
    %c0_67 = arith.constant 0 : index
    %67 = vector.load %arg8[%c104, %c0_67] : memref<108x512xbf16, #tpu.memory_space<vmem>>, vector<4x512xbf16>
    tpu.vector_store %arg8[%c104, %c0_67], %66 {strides = array<i32>} : memref<108x512xbf16, #tpu.memory_space<vmem>>, vector<4x512xbf16>,
    %c0_68 = arith.constant 0 : index
    %c0_69 = arith.constant 0 : index
    %68 = vector.load %arg3[%c0_68, %c0_69] : memref<32x108xbf16, #tpu.memory_space<vmem>>, vector<32x108xbf16>
    %c0_70 = arith.constant 0 : index
    %c0_71 = arith.constant 0 : index
    %69 = vector.load %arg8[%c0_70, %c0_71] : memref<108x512xbf16, #tpu.memory_space<vmem>>, vector<108x512xbf16>
    %cst = arith.constant dense<0.000000e+00> : vector<32x512xf32>
    %70 = tpu.matmul %68, %69, %cst {dimension_numbers = #tpu.dot_dimension_numbers<[1], [0], [0], [1], [0, 0, 1, 1], [], []>} : vector<32x108xbf16>, vector<108x512xbf16>, vector<32x512xf32> -> vector<32x512xf32>
    %c0_72 = arith.constant 0 : index
    %c0_73 = arith.constant 0 : index
    %71 = vector.load %arg4[%c0_72, %c0_73] : memref<32x1xf32, #tpu.memory_space<vmem>>, vector<32x1xf32>
    %72 = vector.broadcast %71 : vector<32x1xf32> to vector<32x512xf32>
    %73 = arith.mulf %70, %72 : vector<32x512xf32>
    %c0_74 = arith.constant 0 : index
    %c0_75 = arith.constant 0 : index
    %74 = vector.load %arg5[%c0_74, %c0_75] : memref<32x1xf32, #tpu.memory_space<vmem>>, vector<32x1xf32>
    %75 = vector.broadcast %74 : vector<32x1xf32> to vector<32x512xf32>
    %76 = arith.addf %73, %75 : vector<32x512xf32>
    %cst_76 = arith.constant 0.000000e+00 : f32
    %77 = vector.broadcast %cst_76 : f32 to vector<32x512xf32>
    %78 = arith.maximumf %76, %77 : vector<32x512xf32>
    %c0_77 = arith.constant 0 : index
    %c0_78 = arith.constant 0 : index
    %c0_79 = arith.constant 0 : index
    %79 = vector.load %arg6[%c0_77, %c0_78, %c0_79] : memref<1x32x512xf32, #tpu.memory_space<vmem>>, vector<1x32x512xf32>
    %80 = vector.shape_cast %79 : vector<1x32x512xf32> to vector<32x512xf32>
    %81 = vector.shape_cast %78 : vector<32x512xf32> to vector<1x32x512xf32>
    tpu.vector_store %arg6[%c0_77, %c0_78, %c0_79], %81 {strides = array<i32>} : memref<1x32x512xf32, #tpu.memory_space<vmem>>, vector<1x32x512xf32>,
    return
  }
  func.func @transform_0(%arg0: i32, %arg1: i32) -> (i32, i32, i32, i32) {
    %c0_i32 = arith.constant 0 : i32
    %c0_i32_0 = arith.constant 0 : i32
    %c0_i32_1 = arith.constant 0 : i32
    %c0_i32_2 = arith.constant 0 : i32
    return %arg0, %c0_i32, %c0_i32_0, %c0_i32_1 : i32, i32, i32, i32
  }
  func.func @transform_1(%arg0: i32, %arg1: i32) -> (i32, i32) {
    %c0_i32 = arith.constant 0 : i32
    %c0_i32_0 = arith.constant 0 : i32
    %c0_i32_1 = arith.constant 0 : i32
    return %c0_i32, %c0_i32_0 : i32, i32
  }
  func.func @transform_2(%arg0: i32, %arg1: i32) -> (i32, i32) {
    %c0_i32 = arith.constant 0 : i32
    %c0_i32_0 = arith.constant 0 : i32
    %c0_i32_1 = arith.constant 0 : i32
    return %c0_i32, %c0_i32_0 : i32, i32
  }
  func.func @transform_3(%arg0: i32, %arg1: i32) -> (i32, i32) {
    %c0_i32 = arith.constant 0 : i32
    %c0_i32_0 = arith.constant 0 : i32
    %c0_i32_1 = arith.constant 0 : i32
    return %c0_i32, %c0_i32_0 : i32, i32
  }
  func.func @transform_4(%arg0: i32, %arg1: i32) -> (i32, i32, i32) {
    %c0_i32 = arith.constant 0 : i32
    %c0_i32_0 = arith.constant 0 : i32
    return %arg0, %c0_i32, %arg1 : i32, i32, i32
  }
}

</mosaic_0001>

<llo_original>
// kernel: tpu_custom_call.1
$region0: #{tpu_custom_call.1}
  #allocation0 [shape = 'u32[]', space=smem, size = 0x4, offset = 0x4, fixed_abs, tag = 'smem constant byte address 0x4 - core index']
  #allocation1 [shape = 'u32[144,128]{1,0:T(1,128)}', space=vmem, size = 0x12000, scoped, tag = 'internal scratch']
  #allocation2 [shape = 'bf16[4,1536]{1,0:T(4,128)(2,1)}', space=vmem, size = 0x3000, scoped, tag = 'scratch operand']
  #allocation3 [shape = 'bf16[108,512]{1,0:T(8,128)(2,1)}', space=vmem, size = 0x1c000, scoped, tag = 'scratch operand']
  %s0 = inlined_call_operand.hbm [shape: bf16[2,14,4,512], index: 0, kind: input, shape index: {}]
  %s1 = inlined_call_operand.hbm [shape: bf16[32,108], index: 1, kind: input, shape index: {}]
  %s2 = inlined_call_operand.vmem [shape: f32[32,1], index: 2, kind: input, shape index: {}]
  %s3 = inlined_call_operand.vmem [shape: f32[32,1], index: 3, kind: input, shape index: {}]
  %s4 = inlined_call_operand.hbm [shape: f32[2,32,6144], index: 4, kind: output, shape index: {}]
  %s5 = sld [smem:[#allocation0]]
  $region57: #{tpu_custom_call.1} parent=0
    _
  %s7 = ssub.s32 1, %s5
  %s8 = scalar_select 0, %s7, %s5
  $region1: #{tpu_custom_call.1} parent=0
    #allocation4 [shape = 'u8[114688]{0}', space=vmem, size = 0x1c000, scoped, tag = 'input window, operand 0']
    #allocation5 [shape = 's32[2]{0}', space=sflag, size = 0x8, scoped, tag = 'scoped memory for tpu_custom_call.1']
    #allocation6 [shape = 's32[2]{0}', space=sflag, size = 0x8, scoped, tag = 'scoped memory for tpu_custom_call.1']
    #allocation7 [shape = 'u8[8192]{0}', space=vmem, size = 0x2000, scoped, tag = 'input window, operand 1, single buffered']
    #allocation8 [shape = 's32[1]{0}', space=sflag, size = 0x4, scoped, tag = 'scoped memory for tpu_custom_call.1']
    #allocation9 [shape = 'u8[131072]{0}', space=vmem, size = 0x20000, scoped, tag = 'output window, operand 0']
    %9 = vsyncpa [#allocation5], 0
    %s10 = scalar_lea.sflag [#allocation5], 1
    %11 = vsyncpa %s10, 0
    %12 = vsyncpa [#allocation8], 0
    %13 = vsyncpa [#allocation6], 0
    %s14 = scalar_lea.sflag [#allocation6], 1
    %15 = vsyncpa %s14, 0
    loop: start=0, step=1, limit=26
    $region2: #{tpu_custom_call.1} parent=1 // loop_pre_header
      _
    $region3: #{tpu_custom_call.1} parent=1 // loop_header
      %s17 = sphi 0, %s21
      %p18 = scmp.ge.s32.totalorder %s17, 26
      %s24 = sphi 0, %s36
      %s25 = sphi 0, %s32
      %s26 = sphi 0, %s24
      %s27 = sphi 0, %s25
      %s28 = sphi 0, %s26
      %s29 = sphi 0, %s27
      %s39 = sphi 0, %s41
      %s42 = sphi 0, %s39
      %s43 = sphi 0, %s42
      %s59 = sphi 0, %s43
      %s63 = sphi 0, %s63
      %s65 = sphi 0, %s63
      %s66 = sphi 0, %s65
      %s80 = sphi 0, %s66
      %s84 = sphi 0, %s84
      %s86 = sphi 0, %s84
      %s87 = sphi 0, %s86
      %s101 = sphi 0, %s87
      %s105 = sphi 0, %s105
      %s107 = sphi 0, %s105
      %s108 = sphi 0, %s107
      %s122 = sphi 0, %s108
      %s130 = sphi 0, %s132
      %s133 = sphi 0, %s130
      %s134 = sphi 0, %s133
      %s150 = sphi 0, %s134
    $region4: #{tpu_custom_call.1} parent=1 // loop_header_branch
      %20 = sbr.rel (%p18) target = $region8
    $region5: #{tpu_custom_call.1} parent=1 // loop_body
      %s22 = ssub.s32 %s17, 1
      %s23 = ssub.s32 %s17, 2
      %s30 = sadd.s32 1, %s25
      %p31 = scmp.ge.s32.totalorder %s30, 12
      %s32 = scalar_select %p31, 0, %s30
      %s33 = sadd.s32 1, %s24
      %s34 = scalar_select %p31, %s33, %s24
      %p35 = scmp.ge.s32.totalorder %s34, 2
      %s36 = scalar_select %p35, 0, %s34
      %s37 = ssub.s32 %s24, %s36
      %p38 = scmp.eq.s32.totalorder %s37, 0
      %s40 = sadd.s32 %s39, 1
      %s41 = scalar_select %p38, %s39, %s40
      %p44 = pneg %p38
      %p45 = scmp.eq.s32.totalorder %s17, 23
      %p46 = por %p44, %p45
      %p47 = scmp.ne.s32.totalorder %s39, %s42
      %p48 = scmp.eq.s32.totalorder %s17, 0
      %p49 = por %p47, %p48
      %p50 = scmp.ne.s32.totalorder %s39, %s42
      %p51 = scmp.eq.s32.totalorder %s22, 23
      %p52 = por %p50, %p51
      %p53 = scmp.ne.s32.totalorder %s42, %s43
      %p54 = scmp.eq.s32.totalorder %s22, 0
      %p55 = por %p53, %p54
      %p56 = scmp.ne.s32.totalorder %s42, %s43
      %p57 = scmp.eq.s32.totalorder %s23, 23
      %p58 = por %p56, %p57
      %p60 = scmp.ne.s32.totalorder %s43, %s59
      %p61 = scmp.eq.s32.totalorder %s23, 0
      %p62 = por %p60, %p61
      %s64 = sadd.s32 %s63, 1
      %p67 = scmp.eq.s32.totalorder %s17, 23
      %p68 = scmp.ne.s32.totalorder %s63, %s65
      %p69 = scmp.eq.s32.totalorder %s17, 0
      %p70 = por %p68, %p69
      %p71 = scmp.ne.s32.totalorder %s63, %s65
      %p72 = scmp.eq.s32.totalorder %s22, 23
      %p73 = por %p71, %p72
      %p74 = scmp.ne.s32.totalorder %s65, %s66
      %p75 = scmp.eq.s32.totalorder %s22, 0
      %p76 = por %p74, %p75
      %p77 = scmp.ne.s32.totalorder %s65, %s66
      %p78 = scmp.eq.s32.totalorder %s23, 23
      %p79 = por %p77, %p78
      %p81 = scmp.ne.s32.totalorder %s66, %s80
      %p82 = scmp.eq.s32.totalorder %s23, 0
      %p83 = por %p81, %p82
      %s85 = sadd.s32 %s84, 1
      %p88 = scmp.eq.s32.totalorder %s17, 23
      %p89 = scmp.ne.s32.totalorder %s84, %s86
      %p90 = scmp.eq.s32.totalorder %s17, 0
      %p91 = por %p89, %p90
      %p92 = scmp.ne.s32.totalorder %s84, %s86
      %p93 = scmp.eq.s32.totalorder %s22, 23
      %p94 = por %p92, %p93
      %p95 = scmp.ne.s32.totalorder %s86, %s87
      %p96 = scmp.eq.s32.totalorder %s22, 0
      %p97 = por %p95, %p96
      %p98 = scmp.ne.s32.totalorder %s86, %s87
      %p99 = scmp.eq.s32.totalorder %s23, 23
      %p100 = por %p98, %p99
      %p102 = scmp.ne.s32.totalorder %s87, %s101
      %p103 = scmp.eq.s32.totalorder %s23, 0
      %p104 = por %p102, %p103
      %s106 = sadd.s32 %s105, 1
      %p109 = scmp.eq.s32.totalorder %s17, 23
      %p110 = scmp.ne.s32.totalorder %s105, %s107
      %p111 = scmp.eq.s32.totalorder %s17, 0
      %p112 = por %p110, %p111
      %p113 = scmp.ne.s32.totalorder %s105, %s107
      %p114 = scmp.eq.s32.totalorder %s22, 23
      %p115 = por %p113, %p114
      %p116 = scmp.ne.s32.totalorder %s107, %s108
      %p117 = scmp.eq.s32.totalorder %s22, 0
      %p118 = por %p116, %p117
      %p119 = scmp.ne.s32.totalorder %s107, %s108
      %p120 = scmp.eq.s32.totalorder %s23, 23
      %p121 = por %p119, %p120
      %p123 = scmp.ne.s32.totalorder %s108, %s122
      %p124 = scmp.eq.s32.totalorder %s23, 0
      %p125 = por %p123, %p124
      %s126 = ssub.s32 %s24, %s36
      %s127 = ssub.s32 %s25, %s32
      %s128 = sor.u32 %s126, %s127
      %p129 = scmp.eq.s32.totalorder %s128, 0
      %s131 = sadd.s32 %s130, 1
      %s132 = scalar_select %p129, %s130, %s131
      %p135 = pneg %p129
      %p136 = scmp.eq.s32.totalorder %s17, 23
      %p137 = por %p135, %p136
      %p138 = scmp.ne.s32.totalorder %s130, %s133
      %p139 = scmp.eq.s32.totalorder %s17, 0
      %p140 = por %p138, %p139
      %p141 = scmp.ne.s32.totalorder %s130, %s133
      %p142 = scmp.eq.s32.totalorder %s22, 23
      %p143 = por %p141, %p142
      %p144 = scmp.ne.s32.totalorder %s133, %s134
      %p145 = scmp.eq.s32.totalorder %s22, 0
      %p146 = por %p144, %p145
      %p147 = scmp.ne.s32.totalorder %s133, %s134
      %p148 = scmp.eq.s32.totalorder %s23, 23
      %p149 = por %p147, %p148
      %p151 = scmp.ne.s32.totalorder %s134, %s150
      %p152 = scmp.eq.s32.totalorder %s23, 0
      %p153 = por %p151, %p152
      %p154 = scmp.le.s32.totalorder 1, %s17
      %p155 = scmp.lt.s32.totalorder %s17, 25
      %p156 = pnand %p154, %p155
      %p157 = pneg %p156
      // Predicated region
      $region9: #{tpu_custom_call.1} parent=5 // pred_check
        _
      $region10: #{tpu_custom_call.1} parent=5 // pred_check_branch
        %159 = sbr.rel (%p156) target = $region12
      $region11: #{tpu_custom_call.1} parent=5 // pred_region
        %s160 = ssub.s32 %s17, 1
        // Predicated region
        $region13: #{tpu_custom_call.1} parent=11 // pred_check
          %p161 = pneg %p76
        $region14: #{tpu_custom_call.1} parent=11 // pred_check_branch
          %163 = sbr.rel (%p161) target = $region16
        $region15: #{tpu_custom_call.1} parent=11 // pred_region
          %s165 = ssub.s32 256, 256
          %166 = vsyncadd [#allocation8], %s165
          %s167 = sshll.u32 [#allocation7], 4
          %s168 = int_to_ptr.vmem [resolvable:$true] %s167
          %173 = dma.hbm_to_vmem [thread:$0]  %s1, 256, %s168, [#allocation8], 64, 64, 4
        $region16: #{tpu_custom_call.1} parent=11 // pred_fallthru
          _
        // Predicated region
        $region17: #{tpu_custom_call.1} parent=11 // pred_check
          %p174 = pneg %p97
        $region18: #{tpu_custom_call.1} parent=11 // pred_check_branch
          %176 = sbr.rel (%p174) target = $region20
        $region19: #{tpu_custom_call.1} parent=11 // pred_region
          _
        $region20: #{tpu_custom_call.1} parent=11 // pred_fallthru
          _
        // Predicated region
        $region21: #{tpu_custom_call.1} parent=11 // pred_check
          %p177 = pneg %p118
        $region22: #{tpu_custom_call.1} parent=11 // pred_check_branch
          %179 = sbr.rel (%p177) target = $region24
        $region23: #{tpu_custom_call.1} parent=11 // pred_region
          _
        $region24: #{tpu_custom_call.1} parent=11 // pred_fallthru
          _
      $region12: #{tpu_custom_call.1} parent=5 // pred_fallthru
        _
      %p180 = scmp.lt.s32.totalorder %s17, 24
      // Predicated region
      $region25: #{tpu_custom_call.1} parent=5 // pred_check
        %p181 = pneg %p180
      $region26: #{tpu_custom_call.1} parent=5 // pred_check_branch
        %183 = sbr.rel (%p181) target = $region28
      $region27: #{tpu_custom_call.1} parent=5 // pred_region
        // Predicated region
        $region29: #{tpu_custom_call.1} parent=27 // pred_check
          %p184 = pneg %p49
        $region30: #{tpu_custom_call.1} parent=27 // pred_check_branch
          %186 = sbr.rel (%p184) target = $region32
        $region31: #{tpu_custom_call.1} parent=27 // pred_region
          %s187 = sand.u32 %s39, 1
          %s188 = scalar_lea.sflag [#allocation5], %s187
          %s189 = sand.u32 %s39, 1
          %s190 = smul.addr %s189, 112
          %s191 = scalar_lea.vmem [#allocation4], %s190
          %s193 = ssub.s32 1792, 1792
          %194 = vsyncadd %s188, %s193
          %s195 = smul.addr %s24, 56
          %s196 = smul.addr %s195, 32
          %s197 = scalar_lea.hbm %s0, %s196
          %s198 = sshll.u32 %s191, 4
          %s199 = int_to_ptr.vmem [resolvable:$true] %s198
          %204 = dma.hbm_to_vmem [thread:$0]  %s197, 1792, %s199, %s188, 128, 128, 8
        $region32: #{tpu_custom_call.1} parent=27 // pred_fallthru
          _
      $region28: #{tpu_custom_call.1} parent=5 // pred_fallthru
        _
      %p205 = scmp.le.s32.totalorder 1, %s17
      %p206 = scmp.lt.s32.totalorder %s17, 25
      %p207 = pnand %p205, %p206
      %p208 = pneg %p207
      // Predicated region
      $region33: #{tpu_custom_call.1} parent=5 // pred_check
        _
      $region34: #{tpu_custom_call.1} parent=5 // pred_check_branch
        %210 = sbr.rel (%p207) target = $region36
      $region35: #{tpu_custom_call.1} parent=5 // pred_region
        %s211 = ssub.s32 %s17, 1
        %s212 = sand.u32 %s42, 1
        %s213 = scalar_lea.sflag [#allocation5], %s212
        %s214 = sand.u32 %s42, 1
        %s215 = smul.addr %s214, 112
        %s216 = scalar_lea.vmem [#allocation4], %s215
        // Predicated region
        $region37: #{tpu_custom_call.1} parent=35 // pred_check
          %p217 = pneg %p55
        $region38: #{tpu_custom_call.1} parent=35 // pred_check_branch
          %219 = sbr.rel (%p217) target = $region40
        $region39: #{tpu_custom_call.1} parent=35 // pred_region
          %220 = dma.done %s213, 1792
        $region40: #{tpu_custom_call.1} parent=35 // pred_fallthru
          _
        // Predicated region
        $region41: #{tpu_custom_call.1} parent=35 // pred_check
          %p221 = pneg %p76
        $region42: #{tpu_custom_call.1} parent=35 // pred_check_branch
          %223 = sbr.rel (%p221) target = $region44
        $region43: #{tpu_custom_call.1} parent=35 // pred_region
          %224 = dma.done [#allocation8], 256
        $region44: #{tpu_custom_call.1} parent=35 // pred_fallthru
          _
        %s225 = sand.u32 %s42, 1
        %s226 = scalar_lea.sflag [#allocation5], %s225
        %s227 = sand.u32 %s42, 1
        %s228 = smul.addr %s227, 112
        %s229 = scalar_lea.vmem [#allocation4], %s228
        %p230 = pneg %p55
        %p231 = pneg %p52
        %p232 = pneg %p76
        %p233 = pneg %p73
        %p234 = pneg %p97
        %p235 = pneg %p94
        %p236 = pneg %p118
        %p237 = pneg %p115
        %p238 = pneg %p146
        %p239 = pneg %p143
        %s240 = sand.u32 %s133, 1
        %s241 = scalar_lea.sflag [#allocation6], %s240
        %s242 = sand.u32 %s133, 1
        %s243 = smul.addr %s242, 128
        %s244 = scalar_lea.vmem [#allocation9], %s243
        %s245 = smul.u32 4, %s27
        %s247 = smul.u32 %s27, 4
        %s248 = smul.addr %s247, 2
        %s249 = scalar_lea.vmem %s216, %s248 [#allocation4]
        %v250 = vld [vmem:[%s249] sm:$0xff]
        %251 = vst [vmem:[#allocation2] sm:$0xff] %v250
        %s252 = sadd.s32 %s27, 1
        %s253 = smul.u32 %s252, 4
        %s254 = smul.addr %s253, 2
        %s255 = scalar_lea.vmem %s216, %s254 [#allocation4]
        %v256 = vld [vmem:[%s255] sm:$0xff]
        %257 = vst [vmem:[#allocation2 + $0x8] sm:$0xff] %v256
        %s258 = sadd.s32 %s27, 2
        %s259 = smul.u32 %s258, 4
        %s260 = smul.addr %s259, 2
        %s261 = scalar_lea.vmem %s216, %s260 [#allocation4]
        %v262 = vld [vmem:[%s261] sm:$0xff]
        %263 = vst [vmem:[#allocation2 + $0x10] sm:$0xff] %v262
        %v264 = vld [vmem:[#allocation2 + $0x2] sm:$0xff]
        %v265 = vld [vmem:[#allocation2 + $0xa] sm:$0x3]
        %v268 = vcombine.high %v264, %v264
        %v270 = vunpack.c.l.s4 1983009808
        %v271 = vunpack.c.0.s8 %v270
        %v272 = vlaneseq
        %v273 = vshrl.u32 %v272, 7
        %v274 = vsub.s32 %v271, %v273
        %v275 = vrot.slane %v264, %v274
        %v277 = vunpack.c.l.s4 1983009808
        %v278 = vunpack.c.0.s8 %v277
        %v279 = vlaneseq
        %v280 = vshrl.u32 %v279, 7
        %v281 = vsub.s32 %v278, %v280
        %v282 = vrot.slane %v268, %v281
        %v284 = vunpack.c.l.s4 1983009808
        %v285 = vunpack.c.0.s8 %v284
        %v286 = vlaneseq
        %v287 = vshrl.u32 %v286, 7
        %v288 = vsub.s32 %v285, %v287
        %v289 = vrot.slane %v265, %v288
        %290 = vrot.lane.b32.xlu0 %v275, 87
        %v291 = vpop.permute.xlu0 %290
        %292 = vrot.lane.b32.xlu0 %v282, 87
        %v293 = vpop.permute.xlu0 %292
        %294 = vrot.lane.b32.xlu0 %v289, 87
        %v295 = vpop.permute.xlu0 %294
        %v296 = vrot.slane %v291, 4
        %v297 = vrot.slane %v293, 4
        %v298 = vrot.slane %v295, 4
        %vm299 = vcmask 1043456
        %v300 = vsel %vm299, %v296, %v297
        %vm301 = vcmask 711680
        %v302 = vsel %vm301, %v291, %v300
        %v303 = vsel %vm299, %v297, %v298
        %v304 = vsel %vm301, %v293, %v303
        %307 = vst [vmem:[#allocation3] sm:$0x33] %v302
        %308 = vst [vmem:[#allocation3 + $0x8] sm:$0x33] %v304
        %v309 = vld [vmem:[#allocation2 + $0x2] sm:$0xff]
        %v310 = vld [vmem:[#allocation2 + $0xa] sm:$0x3]
        %v313 = vcombine.low %v309, %v309
        %v315 = vunpack.c.l.s4 1983009808
        %v316 = vunpack.c.0.s8 %v315
        %v317 = vlaneseq
        %v318 = vshrl.u32 %v317, 7
        %v319 = vsub.s32 %v316, %v318
        %v320 = vrot.slane %v313, %v319
        %v322 = vunpack.c.l.s4 1983009808
        %v323 = vunpack.c.0.s8 %v322
        %v324 = vlaneseq
        %v325 = vshrl.u32 %v324, 7
        %v326 = vsub.s32 %v323, %v325
        %v327 = vrot.slane %v309, %v326
        %v328 = vcombine.low %v310, %v310
        %v330 = vunpack.c.l.s4 1983009808
        %v331 = vunpack.c.0.s8 %v330
        %v332 = vlaneseq
        %v333 = vshrl.u32 %v332, 7
        %v334 = vsub.s32 %v331, %v333
        %v335 = vrot.slane %v328, %v334
        %336 = vrot.lane.b32.xlu0 %v320, 86
        %v337 = vpop.permute.xlu0 %336
        %338 = vrot.lane.b32.xlu0 %v327, 86
        %v339 = vpop.permute.xlu0 %338
        %340 = vrot.lane.b32.xlu0 %v335, 86
        %v341 = vpop.permute.xlu0 %340
        %v342 = vrot.slane %v337, 4
        %v343 = vrot.slane %v339, 4
        %v344 = vrot.slane %v341, 4
        %v345 = vsel %vm299, %v342, %v343
        %vm346 = vcmask 703488
        %v347 = vsel %vm346, %v337, %v345
        %v348 = vsel %vm299, %v343, %v344
        %v349 = vsel %vm346, %v339, %v348
        %352 = vst [vmem:[#allocation3] sm:$0xcc] %v347
        %353 = vst [vmem:[#allocation3 + $0x8] sm:$0xcc] %v349
        %v354 = vld [vmem:[#allocation2 + $0x2] sm:$0xff]
        %v355 = vld [vmem:[#allocation2 + $0xa] sm:$0x3]
        %v358 = vcombine.high %v354, %v354
        %v360 = vunpack.c.l.s4 1983009808
        %v361 = vunpack.c.0.s8 %v360
        %v362 = vlaneseq
        %v363 = vshrl.u32 %v362, 7
        %v364 = vsub.s32 %v361, %v363
        %v365 = vrot.slane %v354, %v364
        %v367 = vunpack.c.l.s4 1983009808
        %v368 = vunpack.c.0.s8 %v367
        %v369 = vlaneseq
        %v370 = vshrl.u32 %v369, 7
        %v371 = vsub.s32 %v368, %v370
        %v372 = vrot.slane %v358, %v371
        %v374 = vunpack.c.l.s4 1983009808
        %v375 = vunpack.c.0.s8 %v374
        %v376 = vlaneseq
        %v377 = vshrl.u32 %v376, 7
        %v378 = vsub.s32 %v375, %v377
        %v379 = vrot.slane %v355, %v378
        %380 = vrot.lane.b32.xlu0 %v365, 85
        %v381 = vpop.permute.xlu0 %380
        %382 = vrot.lane.b32.xlu0 %v372, 85
        %v383 = vpop.permute.xlu0 %382
        %384 = vrot.lane.b32.xlu0 %v379, 85
        %v385 = vpop.permute.xlu0 %384
        %v386 = vrot.slane %v381, 4
        %v387 = vrot.slane %v383, 4
        %v388 = vrot.slane %v385, 4
        %v389 = vsel %vm299, %v386, %v387
        %vm390 = vcmask 695296
        %v391 = vsel %vm390, %v381, %v389
        %v392 = vsel %vm299, %v387, %v388
        %v393 = vsel %vm390, %v383, %v392
        %396 = vst [vmem:[#allocation3 + $0x10] sm:$0x33] %v391
        %397 = vst [vmem:[#allocation3 + $0x18] sm:$0x33] %v393
        %v398 = vld [vmem:[#allocation2 + $0x2] sm:$0xff]
        %v399 = vld [vmem:[#allocation2 + $0xa] sm:$0x3]
        %v402 = vcombine.low %v398, %v398
        %v404 = vunpack.c.l.s4 1983009808
        %v405 = vunpack.c.0.s8 %v404
        %v406 = vlaneseq
        %v407 = vshrl.u32 %v406, 7
        %v408 = vsub.s32 %v405, %v407
        %v409 = vrot.slane %v402, %v408
        %v411 = vunpack.c.l.s4 1983009808
        %v412 = vunpack.c.0.s8 %v411
        %v413 = vlaneseq
        %v414 = vshrl.u32 %v413, 7
        %v415 = vsub.s32 %v412, %v414
        %v416 = vrot.slane %v398, %v415
        %v417 = vcombine.low %v399, %v399
        %v419 = vunpack.c.l.s4 1983009808
        %v420 = vunpack.c.0.s8 %v419
        %v421 = vlaneseq
        %v422 = vshrl.u32 %v421, 7
        %v423 = vsub.s32 %v420, %v422
        %v424 = vrot.slane %v417, %v423
        %425 = vrot.lane.b32.xlu0 %v409, 69
        %v426 = vpop.permute.xlu0 %425
        %427 = vrot.lane.b32.xlu0 %v416, 69
        %v428 = vpop.permute.xlu0 %427
        %429 = vrot.lane.b32.xlu0 %v424, 69
        %v430 = vpop.permute.xlu0 %429
        %v431 = vrot.slane %v426, 4
        %v432 = vrot.slane %v428, 4
        %v433 = vrot.slane %v430, 4
        %v434 = vsel %vm299, %v431, %v432
        %vm435 = vcmask 564224
        %v436 = vsel %vm435, %v426, %v434
        %v437 = vsel %vm299, %v432, %v433
        %v438 = vsel %vm435, %v428, %v437
        %441 = vst [vmem:[#allocation3 + $0x10] sm:$0xcc] %v436
        %442 = vst [vmem:[#allocation3 + $0x18] sm:$0xcc] %v438
        %v443 = vld [vmem:[#allocation2 + $0x2] sm:$0xff]
        %v444 = vld [vmem:[#allocation2 + $0xa] sm:$0x3]
        %v447 = vcombine.high %v443, %v443
        %v449 = vunpack.c.l.s4 1983009808
        %v450 = vunpack.c.0.s8 %v449
        %v451 = vlaneseq
        %v452 = vshrl.u32 %v451, 7
        %v453 = vsub.s32 %v450, %v452
        %v454 = vrot.slane %v443, %v453
        %v456 = vunpack.c.l.s4 1983009808
        %v457 = vunpack.c.0.s8 %v456
        %v458 = vlaneseq
        %v459 = vshrl.u32 %v458, 7
        %v460 = vsub.s32 %v457, %v459
        %v461 = vrot.slane %v447, %v460
        %v463 = vunpack.c.l.s4 1983009808
        %v464 = vunpack.c.0.s8 %v463
        %v465 = vlaneseq
        %v466 = vshrl.u32 %v465, 7
        %v467 = vsub.s32 %v464, %v466
        %v468 = vrot.slane %v444, %v467
        %469 = vrot.lane.b32.xlu0 %v454, 68
        %v470 = vpop.permute.xlu0 %469
        %471 = vrot.lane.b32.xlu0 %v461, 68
        %v472 = vpop.permute.xlu0 %471
        %473 = vrot.lane.b32.xlu0 %v468, 68
        %v474 = vpop.permute.xlu0 %473
        %v475 = vrot.slane %v470, 4
        %v476 = vrot.slane %v472, 4
        %v477 = vrot.slane %v474, 4
        %v478 = vsel %vm299, %v475, %v476
        %vm479 = vcmask 556032
        %v480 = vsel %vm479, %v470, %v478
        %v481 = vsel %vm299, %v476, %v477
        %v482 = vsel %vm479, %v472, %v481
        %485 = vst [vmem:[#allocation3 + $0x20] sm:$0x33] %v480
        %486 = vst [vmem:[#allocation3 + $0x28] sm:$0x33] %v482
        %v487 = vld [vmem:[#allocation2 + $0x2] sm:$0xff]
        %v488 = vld [vmem:[#allocation2 + $0xa] sm:$0x3]
        %v491 = vcombine.low %v487, %v487
        %v493 = vunpack.c.l.s4 1983009808
        %v494 = vunpack.c.0.s8 %v493
        %v495 = vlaneseq
        %v496 = vshrl.u32 %v495, 7
        %v497 = vsub.s32 %v494, %v496
        %v498 = vrot.slane %v491, %v497
        %v500 = vunpack.c.l.s4 1983009808
        %v501 = vunpack.c.0.s8 %v500
        %v502 = vlaneseq
        %v503 = vshrl.u32 %v502, 7
        %v504 = vsub.s32 %v501, %v503
        %v505 = vrot.slane %v487, %v504
        %v506 = vcombine.low %v488, %v488
        %v508 = vunpack.c.l.s4 1983009808
        %v509 = vunpack.c.0.s8 %v508
        %v510 = vlaneseq
        %v511 = vshrl.u32 %v510, 7
        %v512 = vsub.s32 %v509, %v511
        %v513 = vrot.slane %v506, %v512
        %514 = vrot.lane.b32.xlu0 %v498, 67
        %v515 = vpop.permute.xlu0 %514
        %516 = vrot.lane.b32.xlu0 %v505, 67
        %v517 = vpop.permute.xlu0 %516
        %518 = vrot.lane.b32.xlu0 %v513, 67
        %v519 = vpop.permute.xlu0 %518
        %v520 = vrot.slane %v515, 4
        %v521 = vrot.slane %v517, 4
        %v522 = vrot.slane %v519, 4
        %v523 = vsel %vm299, %v520, %v521
        %vm524 = vcmask 547840
        %v525 = vsel %vm524, %v515, %v523
        %v526 = vsel %vm299, %v521, %v522
        %v527 = vsel %vm524, %v517, %v526
        %530 = vst [vmem:[#allocation3 + $0x20] sm:$0xcc] %v525
        %531 = vst [vmem:[#allocation3 + $0x28] sm:$0xcc] %v527
        %v532 = vld [vmem:[#allocation2 + $0x2] sm:$0xff]
        %v533 = vld [vmem:[#allocation2 + $0xa] sm:$0x3]
        %v536 = vcombine.high %v532, %v532
        %v538 = vunpack.c.l.s4 1983009808
        %v539 = vunpack.c.0.s8 %v538
        %v540 = vlaneseq
        %v541 = vshrl.u32 %v540, 7
        %v542 = vsub.s32 %v539, %v541
        %v543 = vrot.slane %v532, %v542
        %v545 = vunpack.c.l.s4 1983009808
        %v546 = vunpack.c.0.s8 %v545
        %v547 = vlaneseq
        %v548 = vshrl.u32 %v547, 7
        %v549 = vsub.s32 %v546, %v548
        %v550 = vrot.slane %v536, %v549
        %v552 = vunpack.c.l.s4 1983009808
        %v553 = vunpack.c.0.s8 %v552
        %v554 = vlaneseq
        %v555 = vshrl.u32 %v554, 7
        %v556 = vsub.s32 %v553, %v555
        %v557 = vrot.slane %v533, %v556
        %558 = vrot.lane.b32.xlu0 %v543, 51
        %v559 = vpop.permute.xlu0 %558
        %560 = vrot.lane.b32.xlu0 %v550, 51
        %v561 = vpop.permute.xlu0 %560
        %562 = vrot.lane.b32.xlu0 %v557, 51
        %v563 = vpop.permute.xlu0 %562
        %v564 = vrot.slane %v559, 4
        %v565 = vrot.slane %v561, 4
        %v566 = vrot.slane %v563, 4
        %v567 = vsel %vm299, %v564, %v565
        %vm568 = vcmask 416768
        %v569 = vsel %vm568, %v559, %v567
        %v570 = vsel %vm299, %v565, %v566
        %v571 = vsel %vm568, %v561, %v570
        %574 = vst [vmem:[#allocation3 + $0x30] sm:$0x33] %v569
        %575 = vst [vmem:[#allocation3 + $0x38] sm:$0x33] %v571
        %v576 = vld [vmem:[#allocation2 + $0x2] sm:$0xff]
        %v577 = vld [vmem:[#allocation2 + $0xa] sm:$0x3]
        %v580 = vcombine.low %v576, %v576
        %v582 = vunpack.c.l.s4 1983009808
        %v583 = vunpack.c.0.s8 %v582
        %v584 = vlaneseq
        %v585 = vshrl.u32 %v584, 7
        %v586 = vsub.s32 %v583, %v585
        %v587 = vrot.slane %v580, %v586
        %v589 = vunpack.c.l.s4 1983009808
        %v590 = vunpack.c.0.s8 %v589
        %v591 = vlaneseq
        %v592 = vshrl.u32 %v591, 7
        %v593 = vsub.s32 %v590, %v592
        %v594 = vrot.slane %v576, %v593
        %v595 = vcombine.low %v577, %v577
        %v597 = vunpack.c.l.s4 1983009808
        %v598 = vunpack.c.0.s8 %v597
        %v599 = vlaneseq
        %v600 = vshrl.u32 %v599, 7
        %v601 = vsub.s32 %v598, %v600
        %v602 = vrot.slane %v595, %v601
        %603 = vrot.lane.b32.xlu0 %v587, 50
        %v604 = vpop.permute.xlu0 %603
        %605 = vrot.lane.b32.xlu0 %v594, 50
        %v606 = vpop.permute.xlu0 %605
        %607 = vrot.lane.b32.xlu0 %v602, 50
        %v608 = vpop.permute.xlu0 %607
        %v609 = vrot.slane %v604, 4
        %v610 = vrot.slane %v606, 4
        %v611 = vrot.slane %v608, 4
        %v612 = vsel %vm299, %v609, %v610
        %vm613 = vcmask 408576
        %v614 = vsel %vm613, %v604, %v612
        %v615 = vsel %vm299, %v610, %v611
        %v616 = vsel %vm613, %v606, %v615
        %619 = vst [vmem:[#allocation3 + $0x30] sm:$0xcc] %v614
        %620 = vst [vmem:[#allocation3 + $0x38] sm:$0xcc] %v616
        %v621 = vld [vmem:[#allocation2 + $0x2] sm:$0xff]
        %v622 = vld [vmem:[#allocation2 + $0xa] sm:$0x3]
        %v625 = vcombine.high %v621, %v621
        %v627 = vunpack.c.l.s4 1983009808
        %v628 = vunpack.c.0.s8 %v627
        %v629 = vlaneseq
        %v630 = vshrl.u32 %v629, 7
        %v631 = vsub.s32 %v628, %v630
        %v632 = vrot.slane %v621, %v631
        %v634 = vunpack.c.l.s4 1983009808
        %v635 = vunpack.c.0.s8 %v634
        %v636 = vlaneseq
        %v637 = vshrl.u32 %v636, 7
        %v638 = vsub.s32 %v635, %v637
        %v639 = vrot.slane %v625, %v638
        %v641 = vunpack.c.l.s4 1983009808
        %v642 = vunpack.c.0.s8 %v641
        %v643 = vlaneseq
        %v644 = vshrl.u32 %v643, 7
        %v645 = vsub.s32 %v642, %v644
        %v646 = vrot.slane %v622, %v645
        %647 = vrot.lane.b32.xlu0 %v632, 49
        %v648 = vpop.permute.xlu0 %647
        %649 = vrot.lane.b32.xlu0 %v639, 49
        %v650 = vpop.permute.xlu0 %649
        %651 = vrot.lane.b32.xlu0 %v646, 49
        %v652 = vpop.permute.xlu0 %651
        %v653 = vrot.slane %v648, 4
        %v654 = vrot.slane %v650, 4
        %v655 = vrot.slane %v652, 4
        %v656 = vsel %vm299, %v653, %v654
        %vm657 = vcmask 400384
        %v658 = vsel %vm657, %v648, %v656
        %v659 = vsel %vm299, %v654, %v655
        %v660 = vsel %vm657, %v650, %v659
        %663 = vst [vmem:[#allocation3 + $0x40] sm:$0x33] %v658
        %664 = vst [vmem:[#allocation3 + $0x48] sm:$0x33] %v660
        %v665 = vld [vmem:[#allocation2 + $0x6] sm:$0xff]
        %v666 = vld [vmem:[#allocation2 + $0xe] sm:$0x3]
        %v669 = vcombine.low %v665, %v665
        %v671 = vunpack.c.l.s4 1983009808
        %v672 = vunpack.c.0.s8 %v671
        %v673 = vlaneseq
        %v674 = vshrl.u32 %v673, 7
        %v675 = vsub.s32 %v672, %v674
        %v676 = vrot.slane %v669, %v675
        %v678 = vunpack.c.l.s4 1983009808
        %v679 = vunpack.c.0.s8 %v678
        %v680 = vlaneseq
        %v681 = vshrl.u32 %v680, 7
        %v682 = vsub.s32 %v679, %v681
        %v683 = vrot.slane %v665, %v682
        %v684 = vcombine.low %v666, %v666
        %v686 = vunpack.c.l.s4 1983009808
        %v687 = vunpack.c.0.s8 %v686
        %v688 = vlaneseq
        %v689 = vshrl.u32 %v688, 7
        %v690 = vsub.s32 %v687, %v689
        %v691 = vrot.slane %v684, %v690
        %692 = vrot.lane.b32.xlu0 %v676, 19
        %v693 = vpop.permute.xlu0 %692
        %694 = vrot.lane.b32.xlu0 %v683, 19
        %v695 = vpop.permute.xlu0 %694
        %696 = vrot.lane.b32.xlu0 %v691, 19
        %v697 = vpop.permute.xlu0 %696
        %v698 = vrot.slane %v693, 4
        %v699 = vrot.slane %v695, 4
        %v700 = vrot.slane %v697, 4
        %v701 = vsel %vm299, %v698, %v699
        %vm702 = vcmask 154624
        %v703 = vsel %vm702, %v693, %v701
        %v704 = vsel %vm299, %v699, %v700
        %v705 = vsel %vm702, %v695, %v704
        %708 = vst [vmem:[#allocation3 + $0x40] sm:$0xcc] %v703
        %709 = vst [vmem:[#allocation3 + $0x48] sm:$0xcc] %v705
        %v710 = vld [vmem:[#allocation2 + $0x6] sm:$0xff]
        %v711 = vld [vmem:[#allocation2 + $0xe] sm:$0x3]
        %v714 = vcombine.high %v710, %v710
        %v716 = vunpack.c.l.s4 1983009808
        %v717 = vunpack.c.0.s8 %v716
        %v718 = vlaneseq
        %v719 = vshrl.u32 %v718, 7
        %v720 = vsub.s32 %v717, %v719
        %v721 = vrot.slane %v710, %v720
        %v723 = vunpack.c.l.s4 1983009808
        %v724 = vunpack.c.0.s8 %v723
        %v725 = vlaneseq
        %v726 = vshrl.u32 %v725, 7
        %v727 = vsub.s32 %v724, %v726
        %v728 = vrot.slane %v714, %v727
        %v730 = vunpack.c.l.s4 1983009808
        %v731 = vunpack.c.0.s8 %v730
        %v732 = vlaneseq
        %v733 = vshrl.u32 %v732, 7
        %v734 = vsub.s32 %v731, %v733
        %v735 = vrot.slane %v711, %v734
        %736 = vrot.lane.b32.xlu0 %v721, 18
        %v737 = vpop.permute.xlu0 %736
        %738 = vrot.lane.b32.xlu0 %v728, 18
        %v739 = vpop.permute.xlu0 %738
        %740 = vrot.lane.b32.xlu0 %v735, 18
        %v741 = vpop.permute.xlu0 %740
        %v742 = vrot.slane %v737, 4
        %v743 = vrot.slane %v739, 4
        %v744 = vrot.slane %v741, 4
        %v745 = vsel %vm299, %v742, %v743
        %vm746 = vcmask 146432
        %v747 = vsel %vm746, %v737, %v745
        %v748 = vsel %vm299, %v743, %v744
        %v749 = vsel %vm746, %v739, %v748
        %752 = vst [vmem:[#allocation3 + $0x50] sm:$0x33] %v747
        %753 = vst [vmem:[#allocation3 + $0x58] sm:$0x33] %v749
        %v754 = vld [vmem:[#allocation2 + $0x6] sm:$0xff]
        %v755 = vld [vmem:[#allocation2 + $0xe] sm:$0x3]
        %v758 = vcombine.low %v754, %v754
        %v760 = vunpack.c.l.s4 1983009808
        %v761 = vunpack.c.0.s8 %v760
        %v762 = vlaneseq
        %v763 = vshrl.u32 %v762, 7
        %v764 = vsub.s32 %v761, %v763
        %v765 = vrot.slane %v758, %v764
        %v767 = vunpack.c.l.s4 1983009808
        %v768 = vunpack.c.0.s8 %v767
        %v769 = vlaneseq
        %v770 = vshrl.u32 %v769, 7
        %v771 = vsub.s32 %v768, %v770
        %v772 = vrot.slane %v754, %v771
        %v773 = vcombine.low %v755, %v755
        %v775 = vunpack.c.l.s4 1983009808
        %v776 = vunpack.c.0.s8 %v775
        %v777 = vlaneseq
        %v778 = vshrl.u32 %v777, 7
        %v779 = vsub.s32 %v776, %v778
        %v780 = vrot.slane %v773, %v779
        %781 = vrot.lane.b32.xlu0 %v765, 17
        %v782 = vpop.permute.xlu0 %781
        %783 = vrot.lane.b32.xlu0 %v772, 17
        %v784 = vpop.permute.xlu0 %783
        %785 = vrot.lane.b32.xlu0 %v780, 17
        %v786 = vpop.permute.xlu0 %785
        %v787 = vrot.slane %v782, 4
        %v788 = vrot.slane %v784, 4
        %v789 = vrot.slane %v786, 4
        %v790 = vsel %vm299, %v787, %v788
        %vm791 = vcmask 138240
        %v792 = vsel %vm791, %v782, %v790
        %v793 = vsel %vm299, %v788, %v789
        %v794 = vsel %vm791, %v784, %v793
        %797 = vst [vmem:[#allocation3 + $0x50] sm:$0xcc] %v792
        %798 = vst [vmem:[#allocation3 + $0x58] sm:$0xcc] %v794
        %v799 = vld [vmem:[#allocation2 + $0x6] sm:$0xff]
        %v800 = vld [vmem:[#allocation2 + $0xe] sm:$0x3]
        %v803 = vcombine.high %v799, %v799
        %v805 = vunpack.c.l.s4 1983009808
        %v806 = vunpack.c.0.s8 %v805
        %v807 = vlaneseq
        %v808 = vshrl.u32 %v807, 7
        %v809 = vsub.s32 %v806, %v808
        %v810 = vrot.slane %v799, %v809
        %v812 = vunpack.c.l.s4 1983009808
        %v813 = vunpack.c.0.s8 %v812
        %v814 = vlaneseq
        %v815 = vshrl.u32 %v814, 7
        %v816 = vsub.s32 %v813, %v815
        %v817 = vrot.slane %v803, %v816
        %v819 = vunpack.c.l.s4 1983009808
        %v820 = vunpack.c.0.s8 %v819
        %v821 = vlaneseq
        %v822 = vshrl.u32 %v821, 7
        %v823 = vsub.s32 %v820, %v822
        %v824 = vrot.slane %v800, %v823
        %825 = vrot.lane.b32.xlu0 %v810, 1
        %v826 = vpop.permute.xlu0 %825
        %827 = vrot.lane.b32.xlu0 %v817, 1
        %v828 = vpop.permute.xlu0 %827
        %829 = vrot.lane.b32.xlu0 %v824, 1
        %v830 = vpop.permute.xlu0 %829
        %v831 = vrot.slane %v826, 4
        %v832 = vrot.slane %v828, 4
        %v833 = vrot.slane %v830, 4
        %v834 = vsel %vm299, %v831, %v832
        %vm835 = vcmask 7168
        %v836 = vsel %vm835, %v826, %v834
        %v837 = vsel %vm299, %v832, %v833
        %v838 = vsel %vm835, %v828, %v837
        %841 = vst [vmem:[#allocation3 + $0x60] sm:$0x33] %v836
        %842 = vst [vmem:[#allocation3 + $0x68] sm:$0x33] %v838
        %v843 = vld [vmem:[#allocation2 + $0x8] sm:$0xff]
        %v845 = vcombine.low %v843, %v843
        %v847 = vunpack.c.l.s4 1983009808
        %v848 = vunpack.c.0.s8 %v847
        %v849 = vlaneseq
        %v850 = vshrl.u32 %v849, 7
        %v851 = vsub.s32 %v848, %v850
        %v852 = vrot.slane %v845, %v851
        %v854 = vunpack.c.l.s4 1983009808
        %v855 = vunpack.c.0.s8 %v854
        %v856 = vlaneseq
        %v857 = vshrl.u32 %v856, 7
        %v858 = vsub.s32 %v855, %v857
        %v859 = vrot.slane %v843, %v858
        %862 = vst [vmem:[#allocation3 + $0x60] sm:$0xcc] %v852
        %863 = vst [vmem:[#allocation3 + $0x68] sm:$0xcc] %v859
        %v864 = vld [vmem:[#allocation2 + $0x8] sm:$0xff]
        %v865 = vld [vmem:[#allocation2 + $0x10] sm:$0x3]
        %v868 = vcombine.high %v864, %v864
        %v870 = vunpack.c.l.s4 1983009808
        %v871 = vunpack.c.0.s8 %v870
        %v872 = vlaneseq
        %v873 = vshrl.u32 %v872, 7
        %v874 = vsub.s32 %v871, %v873
        %v875 = vrot.slane %v864, %v874
        %v877 = vunpack.c.l.s4 1983009808
        %v878 = vunpack.c.0.s8 %v877
        %v879 = vlaneseq
        %v880 = vshrl.u32 %v879, 7
        %v881 = vsub.s32 %v878, %v880
        %v882 = vrot.slane %v868, %v881
        %v884 = vunpack.c.l.s4 1983009808
        %v885 = vunpack.c.0.s8 %v884
        %v886 = vlaneseq
        %v887 = vshrl.u32 %v886, 7
        %v888 = vsub.s32 %v885, %v887
        %v889 = vrot.slane %v865, %v888
        %890 = vrot.lane.b32.xlu0 %v875, 127
        %v891 = vpop.permute.xlu0 %890
        %892 = vrot.lane.b32.xlu0 %v882, 127
        %v893 = vpop.permute.xlu0 %892
        %894 = vrot.lane.b32.xlu0 %v889, 127
        %v895 = vpop.permute.xlu0 %894
        %v896 = vrot.slane %v891, 4
        %v897 = vrot.slane %v893, 4
        %v898 = vrot.slane %v895, 4
        %v899 = vsel %vm299, %v896, %v897
        %vm900 = vcmask 1039360
        %v901 = vsel %vm900, %v891, %v899
        %v902 = vsel %vm299, %v897, %v898
        %v903 = vsel %vm900, %v893, %v902
        %906 = vst [vmem:[#allocation3 + $0x70] sm:$0x33] %v901
        %907 = vst [vmem:[#allocation3 + $0x78] sm:$0x33] %v903
        %v908 = vld [vmem:[#allocation2 + $0x8] sm:$0xff]
        %v909 = vld [vmem:[#allocation2 + $0x10] sm:$0x3]
        %v912 = vcombine.low %v908, %v908
        %v914 = vunpack.c.l.s4 1983009808
        %v915 = vunpack.c.0.s8 %v914
        %v916 = vlaneseq
        %v917 = vshrl.u32 %v916, 7
        %v918 = vsub.s32 %v915, %v917
        %v919 = vrot.slane %v912, %v918
        %v921 = vunpack.c.l.s4 1983009808
        %v922 = vunpack.c.0.s8 %v921
        %v923 = vlaneseq
        %v924 = vshrl.u32 %v923, 7
        %v925 = vsub.s32 %v922, %v924
        %v926 = vrot.slane %v908, %v925
        %v927 = vcombine.low %v909, %v909
        %v929 = vunpack.c.l.s4 1983009808
        %v930 = vunpack.c.0.s8 %v929
        %v931 = vlaneseq
        %v932 = vshrl.u32 %v931, 7
        %v933 = vsub.s32 %v930, %v932
        %v934 = vrot.slane %v927, %v933
        %935 = vrot.lane.b32.xlu0 %v919, 111
        %v936 = vpop.permute.xlu0 %935
        %937 = vrot.lane.b32.xlu0 %v926, 111
        %v938 = vpop.permute.xlu0 %937
        %939 = vrot.lane.b32.xlu0 %v934, 111
        %v940 = vpop.permute.xlu0 %939
        %v941 = vrot.slane %v936, 4
        %v942 = vrot.slane %v938, 4
        %v943 = vrot.slane %v940, 4
        %v944 = vsel %vm299, %v941, %v942
        %vm945 = vcmask 908288
        %v946 = vsel %vm945, %v936, %v944
        %v947 = vsel %vm299, %v942, %v943
        %v948 = vsel %vm945, %v938, %v947
        %951 = vst [vmem:[#allocation3 + $0x70] sm:$0xcc] %v946
        %952 = vst [vmem:[#allocation3 + $0x78] sm:$0xcc] %v948
        %v953 = vld [vmem:[#allocation2 + $0x8] sm:$0xff]
        %v954 = vld [vmem:[#allocation2 + $0x10] sm:$0x3]
        %v957 = vcombine.high %v953, %v953
        %v959 = vunpack.c.l.s4 1983009808
        %v960 = vunpack.c.0.s8 %v959
        %v961 = vlaneseq
        %v962 = vshrl.u32 %v961, 7
        %v963 = vsub.s32 %v960, %v962
        %v964 = vrot.slane %v953, %v963
        %v966 = vunpack.c.l.s4 1983009808
        %v967 = vunpack.c.0.s8 %v966
        %v968 = vlaneseq
        %v969 = vshrl.u32 %v968, 7
        %v970 = vsub.s32 %v967, %v969
        %v971 = vrot.slane %v957, %v970
        %v973 = vunpack.c.l.s4 1983009808
        %v974 = vunpack.c.0.s8 %v973
        %v975 = vlaneseq
        %v976 = vshrl.u32 %v975, 7
        %v977 = vsub.s32 %v974, %v976
        %v978 = vrot.slane %v954, %v977
        %979 = vrot.lane.b32.xlu0 %v964, 110
        %v980 = vpop.permute.xlu0 %979
        %981 = vrot.lane.b32.xlu0 %v971, 110
        %v982 = vpop.permute.xlu0 %981
        %983 = vrot.lane.b32.xlu0 %v978, 110
        %v984 = vpop.permute.xlu0 %983
        %v985 = vrot.slane %v980, 4
        %v986 = vrot.slane %v982, 4
        %v987 = vrot.slane %v984, 4
        %v988 = vsel %vm299, %v985, %v986
        %vm989 = vcmask 900096
        %v990 = vsel %vm989, %v980, %v988
        %v991 = vsel %vm299, %v986, %v987
        %v992 = vsel %vm989, %v982, %v991
        %995 = vst [vmem:[#allocation3 + $0x80] sm:$0x33] %v990
        %996 = vst [vmem:[#allocation3 + $0x88] sm:$0x33] %v992
        %v997 = vld [vmem:[#allocation2 + $0x8] sm:$0xff]
        %v998 = vld [vmem:[#allocation2 + $0x10] sm:$0x3]
        %v1001 = vcombine.low %v997, %v997
        %v1003 = vunpack.c.l.s4 1983009808
        %v1004 = vunpack.c.0.s8 %v1003
        %v1005 = vlaneseq
        %v1006 = vshrl.u32 %v1005, 7
        %v1007 = vsub.s32 %v1004, %v1006
        %v1008 = vrot.slane %v1001, %v1007
        %v1010 = vunpack.c.l.s4 1983009808
        %v1011 = vunpack.c.0.s8 %v1010
        %v1012 = vlaneseq
        %v1013 = vshrl.u32 %v1012, 7
        %v1014 = vsub.s32 %v1011, %v1013
        %v1015 = vrot.slane %v997, %v1014
        %v1016 = vcombine.low %v998, %v998
        %v1018 = vunpack.c.l.s4 1983009808
        %v1019 = vunpack.c.0.s8 %v1018
        %v1020 = vlaneseq
        %v1021 = vshrl.u32 %v1020, 7
        %v1022 = vsub.s32 %v1019, %v1021
        %v1023 = vrot.slane %v1016, %v1022
        %1024 = vrot.lane.b32.xlu0 %v1008, 109
        %v1025 = vpop.permute.xlu0 %1024
        %1026 = vrot.lane.b32.xlu0 %v1015, 109
        %v1027 = vpop.permute.xlu0 %1026
        %1028 = vrot.lane.b32.xlu0 %v1023, 109
        %v1029 = vpop.permute.xlu0 %1028
        %v1030 = vrot.slane %v1025, 4
        %v1031 = vrot.slane %v1027, 4
        %v1032 = vrot.slane %v1029, 4
        %v1033 = vsel %vm299, %v1030, %v1031
        %vm1034 = vcmask 891904
        %v1035 = vsel %vm1034, %v1025, %v1033
        %v1036 = vsel %vm299, %v1031, %v1032
        %v1037 = vsel %vm1034, %v1027, %v1036
        %1040 = vst [vmem:[#allocation3 + $0x80] sm:$0xcc] %v1035
        %1041 = vst [vmem:[#allocation3 + $0x88] sm:$0xcc] %v1037
        %v1042 = vld [vmem:[#allocation2 + $0xc] sm:$0xff]
        %v1043 = vld [vmem:[#allocation2 + $0x14] sm:$0x3]
        %v1046 = vcombine.high %v1042, %v1042
        %v1048 = vunpack.c.l.s4 1983009808
        %v1049 = vunpack.c.0.s8 %v1048
        %v1050 = vlaneseq
        %v1051 = vshrl.u32 %v1050, 7
        %v1052 = vsub.s32 %v1049, %v1051
        %v1053 = vrot.slane %v1042, %v1052
        %v1055 = vunpack.c.l.s4 1983009808
        %v1056 = vunpack.c.0.s8 %v1055
        %v1057 = vlaneseq
        %v1058 = vshrl.u32 %v1057, 7
        %v1059 = vsub.s32 %v1056, %v1058
        %v1060 = vrot.slane %v1046, %v1059
        %v1062 = vunpack.c.l.s4 1983009808
        %v1063 = vunpack.c.0.s8 %v1062
        %v1064 = vlaneseq
        %v1065 = vshrl.u32 %v1064, 7
        %v1066 = vsub.s32 %v1063, %v1065
        %v1067 = vrot.slane %v1043, %v1066
        %1068 = vrot.lane.b32.xlu0 %v1053, 79
        %v1069 = vpop.permute.xlu0 %1068
        %1070 = vrot.lane.b32.xlu0 %v1060, 79
        %v1071 = vpop.permute.xlu0 %1070
        %1072 = vrot.lane.b32.xlu0 %v1067, 79
        %v1073 = vpop.permute.xlu0 %1072
        %v1074 = vrot.slane %v1069, 4
        %v1075 = vrot.slane %v1071, 4
        %v1076 = vrot.slane %v1073, 4
        %v1077 = vsel %vm299, %v1074, %v1075
        %vm1078 = vcmask 646144
        %v1079 = vsel %vm1078, %v1069, %v1077
        %v1080 = vsel %vm299, %v1075, %v1076
        %v1081 = vsel %vm1078, %v1071, %v1080
        %1084 = vst [vmem:[#allocation3 + $0x90] sm:$0x33] %v1079
        %1085 = vst [vmem:[#allocation3 + $0x98] sm:$0x33] %v1081
        %v1086 = vld [vmem:[#allocation2 + $0xc] sm:$0xff]
        %v1087 = vld [vmem:[#allocation2 + $0x14] sm:$0x3]
        %v1090 = vcombine.low %v1086, %v1086
        %v1092 = vunpack.c.l.s4 1983009808
        %v1093 = vunpack.c.0.s8 %v1092
        %v1094 = vlaneseq
        %v1095 = vshrl.u32 %v1094, 7
        %v1096 = vsub.s32 %v1093, %v1095
        %v1097 = vrot.slane %v1090, %v1096
        %v1099 = vunpack.c.l.s4 1983009808
        %v1100 = vunpack.c.0.s8 %v1099
        %v1101 = vlaneseq
        %v1102 = vshrl.u32 %v1101, 7
        %v1103 = vsub.s32 %v1100, %v1102
        %v1104 = vrot.slane %v1086, %v1103
        %v1105 = vcombine.low %v1087, %v1087
        %v1107 = vunpack.c.l.s4 1983009808
        %v1108 = vunpack.c.0.s8 %v1107
        %v1109 = vlaneseq
        %v1110 = vshrl.u32 %v1109, 7
        %v1111 = vsub.s32 %v1108, %v1110
        %v1112 = vrot.slane %v1105, %v1111
        %1113 = vrot.lane.b32.xlu0 %v1097, 78
        %v1114 = vpop.permute.xlu0 %1113
        %1115 = vrot.lane.b32.xlu0 %v1104, 78
        %v1116 = vpop.permute.xlu0 %1115
        %1117 = vrot.lane.b32.xlu0 %v1112, 78
        %v1118 = vpop.permute.xlu0 %1117
        %v1119 = vrot.slane %v1114, 4
        %v1120 = vrot.slane %v1116, 4
        %v1121 = vrot.slane %v1118, 4
        %v1122 = vsel %vm299, %v1119, %v1120
        %vm1123 = vcmask 637952
        %v1124 = vsel %vm1123, %v1114, %v1122
        %v1125 = vsel %vm299, %v1120, %v1121
        %v1126 = vsel %vm1123, %v1116, %v1125
        %1129 = vst [vmem:[#allocation3 + $0x90] sm:$0xcc] %v1124
        %1130 = vst [vmem:[#allocation3 + $0x98] sm:$0xcc] %v1126
        %v1131 = vld [vmem:[#allocation2 + $0xc] sm:$0xff]
        %v1132 = vld [vmem:[#allocation2 + $0x14] sm:$0x3]
        %v1135 = vcombine.high %v1131, %v1131
        %v1137 = vunpack.c.l.s4 1983009808
        %v1138 = vunpack.c.0.s8 %v1137
        %v1139 = vlaneseq
        %v1140 = vshrl.u32 %v1139, 7
        %v1141 = vsub.s32 %v1138, %v1140
        %v1142 = vrot.slane %v1131, %v1141
        %v1144 = vunpack.c.l.s4 1983009808
        %v1145 = vunpack.c.0.s8 %v1144
        %v1146 = vlaneseq
        %v1147 = vshrl.u32 %v1146, 7
        %v1148 = vsub.s32 %v1145, %v1147
        %v1149 = vrot.slane %v1135, %v1148
        %v1151 = vunpack.c.l.s4 1983009808
        %v1152 = vunpack.c.0.s8 %v1151
        %v1153 = vlaneseq
        %v1154 = vshrl.u32 %v1153, 7
        %v1155 = vsub.s32 %v1152, %v1154
        %v1156 = vrot.slane %v1132, %v1155
        %1157 = vrot.lane.b32.xlu0 %v1142, 77
        %v1158 = vpop.permute.xlu0 %1157
        %1159 = vrot.lane.b32.xlu0 %v1149, 77
        %v1160 = vpop.permute.xlu0 %1159
        %1161 = vrot.lane.b32.xlu0 %v1156, 77
        %v1162 = vpop.permute.xlu0 %1161
        %v1163 = vrot.slane %v1158, 4
        %v1164 = vrot.slane %v1160, 4
        %v1165 = vrot.slane %v1162, 4
        %v1166 = vsel %vm299, %v1163, %v1164
        %vm1167 = vcmask 629760
        %v1168 = vsel %vm1167, %v1158, %v1166
        %v1169 = vsel %vm299, %v1164, %v1165
        %v1170 = vsel %vm1167, %v1160, %v1169
        %1173 = vst [vmem:[#allocation3 + $0xa0] sm:$0x33] %v1168
        %1174 = vst [vmem:[#allocation3 + $0xa8] sm:$0x33] %v1170
        %v1175 = vld [vmem:[#allocation2 + $0xc] sm:$0xff]
        %v1176 = vld [vmem:[#allocation2 + $0x14] sm:$0x3]
        %v1179 = vcombine.low %v1175, %v1175
        %v1181 = vunpack.c.l.s4 1983009808
        %v1182 = vunpack.c.0.s8 %v1181
        %v1183 = vlaneseq
        %v1184 = vshrl.u32 %v1183, 7
        %v1185 = vsub.s32 %v1182, %v1184
        %v1186 = vrot.slane %v1179, %v1185
        %v1188 = vunpack.c.l.s4 1983009808
        %v1189 = vunpack.c.0.s8 %v1188
        %v1190 = vlaneseq
        %v1191 = vshrl.u32 %v1190, 7
        %v1192 = vsub.s32 %v1189, %v1191
        %v1193 = vrot.slane %v1175, %v1192
        %v1194 = vcombine.low %v1176, %v1176
        %v1196 = vunpack.c.l.s4 1983009808
        %v1197 = vunpack.c.0.s8 %v1196
        %v1198 = vlaneseq
        %v1199 = vshrl.u32 %v1198, 7
        %v1200 = vsub.s32 %v1197, %v1199
        %v1201 = vrot.slane %v1194, %v1200
        %1202 = vrot.lane.b32.xlu0 %v1186, 61
        %v1203 = vpop.permute.xlu0 %1202
        %1204 = vrot.lane.b32.xlu0 %v1193, 61
        %v1205 = vpop.permute.xlu0 %1204
        %1206 = vrot.lane.b32.xlu0 %v1201, 61
        %v1207 = vpop.permute.xlu0 %1206
        %v1208 = vrot.slane %v1203, 4
        %v1209 = vrot.slane %v1205, 4
        %v1210 = vrot.slane %v1207, 4
        %v1211 = vsel %vm299, %v1208, %v1209
        %vm1212 = vcmask 498688
        %v1213 = vsel %vm1212, %v1203, %v1211
        %v1214 = vsel %vm299, %v1209, %v1210
        %v1215 = vsel %vm1212, %v1205, %v1214
        %1218 = vst [vmem:[#allocation3 + $0xa0] sm:$0xcc] %v1213
        %1219 = vst [vmem:[#allocation3 + $0xa8] sm:$0xcc] %v1215
        %v1220 = vld [vmem:[#allocation2 + $0xc] sm:$0xff]
        %v1221 = vld [vmem:[#allocation2 + $0x14] sm:$0x3]
        %v1224 = vcombine.high %v1220, %v1220
        %v1226 = vunpack.c.l.s4 1983009808
        %v1227 = vunpack.c.0.s8 %v1226
        %v1228 = vlaneseq
        %v1229 = vshrl.u32 %v1228, 7
        %v1230 = vsub.s32 %v1227, %v1229
        %v1231 = vrot.slane %v1220, %v1230
        %v1233 = vunpack.c.l.s4 1983009808
        %v1234 = vunpack.c.0.s8 %v1233
        %v1235 = vlaneseq
        %v1236 = vshrl.u32 %v1235, 7
        %v1237 = vsub.s32 %v1234, %v1236
        %v1238 = vrot.slane %v1224, %v1237
        %v1240 = vunpack.c.l.s4 1983009808
        %v1241 = vunpack.c.0.s8 %v1240
        %v1242 = vlaneseq
        %v1243 = vshrl.u32 %v1242, 7
        %v1244 = vsub.s32 %v1241, %v1243
        %v1245 = vrot.slane %v1221, %v1244
        %1246 = vrot.lane.b32.xlu0 %v1231, 60
        %v1247 = vpop.permute.xlu0 %1246
        %1248 = vrot.lane.b32.xlu0 %v1238, 60
        %v1249 = vpop.permute.xlu0 %1248
        %1250 = vrot.lane.b32.xlu0 %v1245, 60
        %v1251 = vpop.permute.xlu0 %1250
        %v1252 = vrot.slane %v1247, 4
        %v1253 = vrot.slane %v1249, 4
        %v1254 = vrot.slane %v1251, 4
        %v1255 = vsel %vm299, %v1252, %v1253
        %vm1256 = vcmask 490496
        %v1257 = vsel %vm1256, %v1247, %v1255
        %v1258 = vsel %vm299, %v1253, %v1254
        %v1259 = vsel %vm1256, %v1249, %v1258
        %1262 = vst [vmem:[#allocation3 + $0xb0] sm:$0x33] %v1257
        %1263 = vst [vmem:[#allocation3 + $0xb8] sm:$0x33] %v1259
        %v1264 = vld [vmem:[#allocation2 + $0xc] sm:$0xff]
        %v1265 = vld [vmem:[#allocation2 + $0x14] sm:$0x3]
        %v1268 = vcombine.low %v1264, %v1264
        %v1270 = vunpack.c.l.s4 1983009808
        %v1271 = vunpack.c.0.s8 %v1270
        %v1272 = vlaneseq
        %v1273 = vshrl.u32 %v1272, 7
        %v1274 = vsub.s32 %v1271, %v1273
        %v1275 = vrot.slane %v1268, %v1274
        %v1277 = vunpack.c.l.s4 1983009808
        %v1278 = vunpack.c.0.s8 %v1277
        %v1279 = vlaneseq
        %v1280 = vshrl.u32 %v1279, 7
        %v1281 = vsub.s32 %v1278, %v1280
        %v1282 = vrot.slane %v1264, %v1281
        %v1283 = vcombine.low %v1265, %v1265
        %v1285 = vunpack.c.l.s4 1983009808
        %v1286 = vunpack.c.0.s8 %v1285
        %v1287 = vlaneseq
        %v1288 = vshrl.u32 %v1287, 7
        %v1289 = vsub.s32 %v1286, %v1288
        %v1290 = vrot.slane %v1283, %v1289
        %1291 = vrot.lane.b32.xlu0 %v1275, 59
        %v1292 = vpop.permute.xlu0 %1291
        %1293 = vrot.lane.b32.xlu0 %v1282, 59
        %v1294 = vpop.permute.xlu0 %1293
        %1295 = vrot.lane.b32.xlu0 %v1290, 59
        %v1296 = vpop.permute.xlu0 %1295
        %v1297 = vrot.slane %v1292, 4
        %v1298 = vrot.slane %v1294, 4
        %v1299 = vrot.slane %v1296, 4
        %v1300 = vsel %vm299, %v1297, %v1298
        %vm1301 = vcmask 482304
        %v1302 = vsel %vm1301, %v1292, %v1300
        %v1303 = vsel %vm299, %v1298, %v1299
        %v1304 = vsel %vm1301, %v1294, %v1303
        %1307 = vst [vmem:[#allocation3 + $0xb0] sm:$0xcc] %v1302
        %1308 = vst [vmem:[#allocation3 + $0xb8] sm:$0xcc] %v1304
        %v1309 = vld [vmem:[#allocation2 + $0xc] sm:$0xff]
        %v1310 = vld [vmem:[#allocation2 + $0x14] sm:$0x3]
        %v1313 = vcombine.high %v1309, %v1309
        %v1315 = vunpack.c.l.s4 1983009808
        %v1316 = vunpack.c.0.s8 %v1315
        %v1317 = vlaneseq
        %v1318 = vshrl.u32 %v1317, 7
        %v1319 = vsub.s32 %v1316, %v1318
        %v1320 = vrot.slane %v1309, %v1319
        %v1322 = vunpack.c.l.s4 1983009808
        %v1323 = vunpack.c.0.s8 %v1322
        %v1324 = vlaneseq
        %v1325 = vshrl.u32 %v1324, 7
        %v1326 = vsub.s32 %v1323, %v1325
        %v1327 = vrot.slane %v1313, %v1326
        %v1329 = vunpack.c.l.s4 1983009808
        %v1330 = vunpack.c.0.s8 %v1329
        %v1331 = vlaneseq
        %v1332 = vshrl.u32 %v1331, 7
        %v1333 = vsub.s32 %v1330, %v1332
        %v1334 = vrot.slane %v1310, %v1333
        %1335 = vrot.lane.b32.xlu0 %v1320, 43
        %v1336 = vpop.permute.xlu0 %1335
        %1337 = vrot.lane.b32.xlu0 %v1327, 43
        %v1338 = vpop.permute.xlu0 %1337
        %1339 = vrot.lane.b32.xlu0 %v1334, 43
        %v1340 = vpop.permute.xlu0 %1339
        %v1341 = vrot.slane %v1336, 4
        %v1342 = vrot.slane %v1338, 4
        %v1343 = vrot.slane %v1340, 4
        %v1344 = vsel %vm299, %v1341, %v1342
        %vm1345 = vcmask 351232
        %v1346 = vsel %vm1345, %v1336, %v1344
        %v1347 = vsel %vm299, %v1342, %v1343
        %v1348 = vsel %vm1345, %v1338, %v1347
        %1351 = vst [vmem:[#allocation3 + $0xc0] sm:$0x33] %v1346
        %1352 = vst [vmem:[#allocation3 + $0xc8] sm:$0x33] %v1348
        %v1353 = vld [vmem:[#allocation2 + $0xc] sm:$0xff]
        %v1354 = vld [vmem:[#allocation2 + $0x14] sm:$0x3]
        %v1357 = vcombine.low %v1353, %v1353
        %v1359 = vunpack.c.l.s4 1983009808
        %v1360 = vunpack.c.0.s8 %v1359
        %v1361 = vlaneseq
        %v1362 = vshrl.u32 %v1361, 7
        %v1363 = vsub.s32 %v1360, %v1362
        %v1364 = vrot.slane %v1357, %v1363
        %v1366 = vunpack.c.l.s4 1983009808
        %v1367 = vunpack.c.0.s8 %v1366
        %v1368 = vlaneseq
        %v1369 = vshrl.u32 %v1368, 7
        %v1370 = vsub.s32 %v1367, %v1369
        %v1371 = vrot.slane %v1353, %v1370
        %v1372 = vcombine.low %v1354, %v1354
        %v1374 = vunpack.c.l.s4 1983009808
        %v1375 = vunpack.c.0.s8 %v1374
        %v1376 = vlaneseq
        %v1377 = vshrl.u32 %v1376, 7
        %v1378 = vsub.s32 %v1375, %v1377
        %v1379 = vrot.slane %v1372, %v1378
        %1380 = vrot.lane.b32.xlu0 %v1364, 42
        %v1381 = vpop.permute.xlu0 %1380
        %1382 = vrot.lane.b32.xlu0 %v1371, 42
        %v1383 = vpop.permute.xlu0 %1382
        %1384 = vrot.lane.b32.xlu0 %v1379, 42
        %v1385 = vpop.permute.xlu0 %1384
        %v1386 = vrot.slane %v1381, 4
        %v1387 = vrot.slane %v1383, 4
        %v1388 = vrot.slane %v1385, 4
        %v1389 = vsel %vm299, %v1386, %v1387
        %vm1390 = vcmask 343040
        %v1391 = vsel %vm1390, %v1381, %v1389
        %v1392 = vsel %vm299, %v1387, %v1388
        %v1393 = vsel %vm1390, %v1383, %v1392
        %1396 = vst [vmem:[#allocation3 + $0xc0] sm:$0xcc] %v1391
        %1397 = vst [vmem:[#allocation3 + $0xc8] sm:$0xcc] %v1393
        %v1398 = vld [vmem:[#allocation2 + $0xc] sm:$0xff]
        %v1399 = vld [vmem:[#allocation2 + $0x14] sm:$0x3]
        %v1402 = vcombine.high %v1398, %v1398
        %v1404 = vunpack.c.l.s4 1983009808
        %v1405 = vunpack.c.0.s8 %v1404
        %v1406 = vlaneseq
        %v1407 = vshrl.u32 %v1406, 7
        %v1408 = vsub.s32 %v1405, %v1407
        %v1409 = vrot.slane %v1398, %v1408
        %v1411 = vunpack.c.l.s4 1983009808
        %v1412 = vunpack.c.0.s8 %v1411
        %v1413 = vlaneseq
        %v1414 = vshrl.u32 %v1413, 7
        %v1415 = vsub.s32 %v1412, %v1414
        %v1416 = vrot.slane %v1402, %v1415
        %v1418 = vunpack.c.l.s4 1983009808
        %v1419 = vunpack.c.0.s8 %v1418
        %v1420 = vlaneseq
        %v1421 = vshrl.u32 %v1420, 7
        %v1422 = vsub.s32 %v1419, %v1421
        %v1423 = vrot.slane %v1399, %v1422
        %1424 = vrot.lane.b32.xlu0 %v1409, 41
        %v1425 = vpop.permute.xlu0 %1424
        %1426 = vrot.lane.b32.xlu0 %v1416, 41
        %v1427 = vpop.permute.xlu0 %1426
        %1428 = vrot.lane.b32.xlu0 %v1423, 41
        %v1429 = vpop.permute.xlu0 %1428
        %v1430 = vrot.slane %v1425, 4
        %v1431 = vrot.slane %v1427, 4
        %v1432 = vrot.slane %v1429, 4
        %v1433 = vsel %vm299, %v1430, %v1431
        %vm1434 = vcmask 334848
        %v1435 = vsel %vm1434, %v1425, %v1433
        %v1436 = vsel %vm299, %v1431, %v1432
        %v1437 = vsel %vm1434, %v1427, %v1436
        %1440 = vst [vmem:[#allocation3 + $0xd0] sm:$0x33] %v1435
        %1441 = vst [vmem:[#allocation3 + $0xd8] sm:$0x33] %v1437
        %v1442 = vld [vmem:[#allocation7] sm:$0xf]
        %v1443 = vld [vmem:[#allocation7 + $0x4] sm:$0xf]
        %v1444 = vld [vmem:[#allocation7 + $0x8] sm:$0xf]
        %v1445 = vld [vmem:[#allocation7 + $0xc] sm:$0xf]
        %v1446 = vld [vmem:[#allocation3] sm:$0xff]
        %v1447 = vld [vmem:[#allocation3 + $0x8] sm:$0xff]
        %v1448 = vld [vmem:[#allocation3 + $0x10] sm:$0xff]
        %v1449 = vld [vmem:[#allocation3 + $0x18] sm:$0xff]
        %v1450 = vld [vmem:[#allocation3 + $0x20] sm:$0xff]
        %v1451 = vld [vmem:[#allocation3 + $0x28] sm:$0xff]
        %v1452 = vld [vmem:[#allocation3 + $0x30] sm:$0xff]
        %v1453 = vld [vmem:[#allocation3 + $0x38] sm:$0xff]
        %v1454 = vld [vmem:[#allocation3 + $0x40] sm:$0xff]
        %v1455 = vld [vmem:[#allocation3 + $0x48] sm:$0xff]
        %v1456 = vld [vmem:[#allocation3 + $0x50] sm:$0xff]
        %v1457 = vld [vmem:[#allocation3 + $0x58] sm:$0xff]
        %v1458 = vld [vmem:[#allocation3 + $0x60] sm:$0xff]
        %v1459 = vld [vmem:[#allocation3 + $0x68] sm:$0xff]
        %v1460 = vld [vmem:[#allocation3 + $0x70] sm:$0xff]
        %v1461 = vld [vmem:[#allocation3 + $0x78] sm:$0xff]
        %v1462 = vld [vmem:[#allocation3 + $0x80] sm:$0xff]
        %v1463 = vld [vmem:[#allocation3 + $0x88] sm:$0xff]
        %v1464 = vld [vmem:[#allocation3 + $0x90] sm:$0xff]
        %v1465 = vld [vmem:[#allocation3 + $0x98] sm:$0xff]
        %v1466 = vld [vmem:[#allocation3 + $0xa0] sm:$0xff]
        %v1467 = vld [vmem:[#allocation3 + $0xa8] sm:$0xff]
        %v1468 = vld [vmem:[#allocation3 + $0xb0] sm:$0xff]
        %v1469 = vld [vmem:[#allocation3 + $0xb8] sm:$0xff]
        %v1470 = vld [vmem:[#allocation3 + $0xc0] sm:$0xff]
        %v1471 = vld [vmem:[#allocation3 + $0xc8] sm:$0xff]
        %v1472 = vld [vmem:[#allocation3 + $0xd0] sm:$0x33]
        %v1473 = vld [vmem:[#allocation3 + $0xd8] sm:$0x33]
        %v1478 = vunpack.c.l.b16 %v1442
        %v1479 = vunpack.c.l.b16 %v1443
        %v1480 = vunpack.c.l.b16 %v1444
        %v1481 = vunpack.c.l.b16 %v1445
        %v1482 = vpack.c.b16 %v1479, %v1478
        %v1483 = vpack.c.b16 %v1481, %v1480
        %v1512 = vunpack.c.l.b16 %v1446
        %v1513 = vunpack.c.h.b16 %v1446
        %v1514 = vunpack.c.l.b16 %v1447
        %v1515 = vunpack.c.h.b16 %v1447
        %v1516 = vunpack.c.l.b16 %v1448
        %v1517 = vunpack.c.h.b16 %v1448
        %v1518 = vunpack.c.l.b16 %v1449
        %v1519 = vunpack.c.h.b16 %v1449
        %v1520 = vunpack.c.l.b16 %v1450
        %v1521 = vunpack.c.h.b16 %v1450
        %v1522 = vunpack.c.l.b16 %v1451
        %v1523 = vunpack.c.h.b16 %v1451
        %v1524 = vunpack.c.l.b16 %v1452
        %v1525 = vunpack.c.h.b16 %v1452
        %v1526 = vunpack.c.l.b16 %v1453
        %v1527 = vunpack.c.h.b16 %v1453
        %v1528 = vunpack.c.l.b16 %v1454
        %v1529 = vunpack.c.h.b16 %v1454
        %v1530 = vunpack.c.l.b16 %v1455
        %v1531 = vunpack.c.h.b16 %v1455
        %v1532 = vunpack.c.l.b16 %v1456
        %v1533 = vunpack.c.h.b16 %v1456
        %v1534 = vunpack.c.l.b16 %v1457
        %v1535 = vunpack.c.h.b16 %v1457
        %v1536 = vunpack.c.l.b16 %v1458
        %v1537 = vunpack.c.h.b16 %v1458
        %v1538 = vunpack.c.l.b16 %v1459
        %v1539 = vunpack.c.h.b16 %v1459
        %v1540 = vunpack.c.l.b16 %v1460
        %v1541 = vunpack.c.h.b16 %v1460
        %v1542 = vunpack.c.l.b16 %v1461
        %v1543 = vunpack.c.h.b16 %v1461
        %v1544 = vunpack.c.l.b16 %v1462
        %v1545 = vunpack.c.h.b16 %v1462
        %v1546 = vunpack.c.l.b16 %v1463
        %v1547 = vunpack.c.h.b16 %v1463
        %v1548 = vunpack.c.l.b16 %v1464
        %v1549 = vunpack.c.h.b16 %v1464
        %v1550 = vunpack.c.l.b16 %v1465
        %v1551 = vunpack.c.h.b16 %v1465
        %v1552 = vunpack.c.l.b16 %v1466
        %v1553 = vunpack.c.h.b16 %v1466
        %v1554 = vunpack.c.l.b16 %v1467
        %v1555 = vunpack.c.h.b16 %v1467
        %v1556 = vunpack.c.l.b16 %v1468
        %v1557 = vunpack.c.h.b16 %v1468
        %v1558 = vunpack.c.l.b16 %v1469
        %v1559 = vunpack.c.h.b16 %v1469
        %v1560 = vunpack.c.l.b16 %v1470
        %v1561 = vunpack.c.h.b16 %v1470
        %v1562 = vunpack.c.l.b16 %v1471
        %v1563 = vunpack.c.h.b16 %v1471
        %v1564 = vunpack.c.l.b16 %v1472
        %v1565 = vunpack.c.h.b16 %v1472
        %v1566 = vunpack.c.l.b16 %v1473
        %v1567 = vunpack.c.h.b16 %v1473
        %v1568 = vpack.c.b16 %v1516, %v1512
        %v1569 = vpack.c.b16 %v1517, %v1513
        %v1570 = vpack.c.b16 %v1518, %v1514
        %v1571 = vpack.c.b16 %v1519, %v1515
        %v1572 = vpack.c.b16 %v1524, %v1520
        %v1573 = vpack.c.b16 %v1525, %v1521
        %v1574 = vpack.c.b16 %v1526, %v1522
        %v1575 = vpack.c.b16 %v1527, %v1523
        %v1576 = vpack.c.b16 %v1532, %v1528
        %v1577 = vpack.c.b16 %v1533, %v1529
        %v1578 = vpack.c.b16 %v1534, %v1530
        %v1579 = vpack.c.b16 %v1535, %v1531
        %v1580 = vpack.c.b16 %v1540, %v1536
        %v1581 = vpack.c.b16 %v1541, %v1537
        %v1582 = vpack.c.b16 %v1542, %v1538
        %v1583 = vpack.c.b16 %v1543, %v1539
        %v1584 = vpack.c.b16 %v1548, %v1544
        %v1585 = vpack.c.b16 %v1549, %v1545
        %v1586 = vpack.c.b16 %v1550, %v1546
        %v1587 = vpack.c.b16 %v1551, %v1547
        %v1588 = vpack.c.b16 %v1556, %v1552
        %v1589 = vpack.c.b16 %v1557, %v1553
        %v1590 = vpack.c.b16 %v1558, %v1554
        %v1591 = vpack.c.b16 %v1559, %v1555
        %v1592 = vpack.c.b16 %v1564, %v1560
        %v1593 = vpack.c.b16 %v1565, %v1561
        %v1594 = vpack.c.b16 %v1566, %v1562
        %v1595 = vpack.c.b16 %v1567, %v1563
        %vm1620 = vcmask 883712
        %v1622 = vsel %vm1620, %v1482, 0
        %v1625 = vsel %vm1620, %v1483, 0
        %vm1627 = vcmask 1045504
        %v1629 = vsel %vm1627, %v1592, 0
        %v1632 = vsel %vm1627, %v1593, 0
        %v1635 = vsel %vm1627, %v1594, 0
        %v1638 = vsel %vm1627, %v1595, 0
        %1640 = vmatprep.subr.bf16.mxu0 %v1569
        %1641 = vmatpush1.bf16.msra.mxu0 %v1568
        %1642 = vmatprep.subr.bf16.mxu0 %v1573
        %1643 = vmatpush1.bf16.msra.mxu0 %v1572
        %1644 = vmatprep.subr.bf16.mxu0 %v1577
        %1645 = vmatpush1.bf16.msra.mxu0 %v1576
        %1646 = vmatprep.subr.bf16.mxu0 %v1581
        %1647 = vmatpush1.bf16.msra.mxu0 %v1580
        %1648 = vmatprep.subr.bf16.mxu0 %v1585
        %1649 = vmatpush1.bf16.msra.mxu0 %v1584
        %1650 = vmatprep.subr.bf16.mxu0 %v1589
        %1651 = vmatpush1.bf16.msra.mxu0 %v1588
        %1652 = vmatprep.subr.bf16.mxu0 %v1632
        %1653 = vmatpush1.bf16.msra.mxu0 %v1629
        %1654 = vmatprep.subr.bf16.mxu0 0
        %1655 = vmatpush1.bf16.msra.mxu0 0
        %1656 = vmatprep.subr.bf16.mxu0 0
        %1657 = vmatpush1.bf16.msra.mxu0 0
        %1658 = vmatprep.subr.bf16.mxu0 0
        %1659 = vmatpush1.bf16.msra.mxu0 0
        %1660 = vmatprep.subr.bf16.mxu0 0
        %1661 = vmatpush1.bf16.msra.mxu0 0
        %1662 = vmatprep.subr.bf16.mxu0 0
        %1663 = vmatpush1.bf16.msra.mxu0 0
        %1664 = vmatprep.subr.bf16.mxu0 0
        %1665 = vmatpush1.bf16.msra.mxu0 0
        %1666 = vmatprep.subr.bf16.mxu0 0
        %1667 = vmatpush1.bf16.msra.mxu0 0
        %1668 = vmatprep.subr.bf16.mxu0 0
        %1669 = vmatpush1.bf16.msra.mxu0 0
        %1670 = vmatprep.subr.bf16.mxu0 0
        %1671 = vmatpush1.bf16.msra.mxu0 0
        %1672 = vmatprep.mubr.bf16.mxu0 0
        %1673 = vmatmul.mubr.bf16.gmra.mrb[0].mxu0 %v1622
        %v1674 = vpop.f32.mrb[0].mxu0
        %v1675 = vadd.f32 0.0, %v1674
        %v1676 = vpop.f32.mrb[0].mxu0
        %v1677 = vadd.f32 0.0, %v1676
        %v1678 = vpop.f32.mrb[0].mxu0
        %v1679 = vadd.f32 0.0, %v1678
        %v1680 = vpop.f32.mrb[0].mxu0
        %v1681 = vadd.f32 0.0, %v1680
        %1682 = vmatprep.mubr.bf16.mxu0 0
        %1683 = vmatmul.mubr.bf16.gmra.mrb[0].mxu0 %v1625
        %v1684 = vpop.f32.mrb[0].mxu0
        %v1685 = vadd.f32 0.0, %v1684
        %v1686 = vpop.f32.mrb[0].mxu0
        %v1687 = vadd.f32 0.0, %v1686
        %v1688 = vpop.f32.mrb[0].mxu0
        %v1689 = vadd.f32 0.0, %v1688
        %v1690 = vpop.f32.mrb[0].mxu0
        %v1691 = vadd.f32 0.0, %v1690
        %1692 = vdwg.mxu0
        %1693 = vmatprep.subr.bf16.mxu0 %v1571
        %1694 = vmatpush1.bf16.msra.mxu0 %v1570
        %1695 = vmatprep.subr.bf16.mxu0 %v1575
        %1696 = vmatpush1.bf16.msra.mxu0 %v1574
        %1697 = vmatprep.subr.bf16.mxu0 %v1579
        %1698 = vmatpush1.bf16.msra.mxu0 %v1578
        %1699 = vmatprep.subr.bf16.mxu0 %v1583
        %1700 = vmatpush1.bf16.msra.mxu0 %v1582
        %1701 = vmatprep.subr.bf16.mxu0 %v1587
        %1702 = vmatpush1.bf16.msra.mxu0 %v1586
        %1703 = vmatprep.subr.bf16.mxu0 %v1591
        %1704 = vmatpush1.bf16.msra.mxu0 %v1590
        %1705 = vmatprep.subr.bf16.mxu0 %v1638
        %1706 = vmatpush1.bf16.msra.mxu0 %v1635
        %1707 = vmatprep.subr.bf16.mxu0 0
        %1708 = vmatpush1.bf16.msra.mxu0 0
        %1709 = vmatprep.subr.bf16.mxu0 0
        %1710 = vmatpush1.bf16.msra.mxu0 0
        %1711 = vmatprep.subr.bf16.mxu0 0
        %1712 = vmatpush1.bf16.msra.mxu0 0
        %1713 = vmatprep.subr.bf16.mxu0 0
        %1714 = vmatpush1.bf16.msra.mxu0 0
        %1715 = vmatprep.subr.bf16.mxu0 0
        %1716 = vmatpush1.bf16.msra.mxu0 0
        %1717 = vmatprep.subr.bf16.mxu0 0
        %1718 = vmatpush1.bf16.msra.mxu0 0
        %1719 = vmatprep.subr.bf16.mxu0 0
        %1720 = vmatpush1.bf16.msra.mxu0 0
        %1721 = vmatprep.subr.bf16.mxu0 0
        %1722 = vmatpush1.bf16.msra.mxu0 0
        %1723 = vmatprep.subr.bf16.mxu0 0
        %1724 = vmatpush1.bf16.msra.mxu0 0
        %1725 = vmatprep.mubr.bf16.mxu0 0
        %1726 = vmatmul.mubr.bf16.gmra.mrb[0].mxu0 %v1622
        %v1727 = vpop.f32.mrb[0].mxu0
        %v1728 = vadd.f32 0.0, %v1727
        %v1729 = vpop.f32.mrb[0].mxu0
        %v1730 = vadd.f32 0.0, %v1729
        %v1731 = vpop.f32.mrb[0].mxu0
        %v1732 = vadd.f32 0.0, %v1731
        %v1733 = vpop.f32.mrb[0].mxu0
        %v1734 = vadd.f32 0.0, %v1733
        %1735 = vmatprep.mubr.bf16.mxu0 0
        %1736 = vmatmul.mubr.bf16.gmra.mrb[0].mxu0 %v1625
        %v1737 = vpop.f32.mrb[0].mxu0
        %v1738 = vadd.f32 0.0, %v1737
        %v1739 = vpop.f32.mrb[0].mxu0
        %v1740 = vadd.f32 0.0, %v1739
        %v1741 = vpop.f32.mrb[0].mxu0
        %v1742 = vadd.f32 0.0, %v1741
        %v1743 = vpop.f32.mrb[0].mxu0
        %v1744 = vadd.f32 0.0, %v1743
        %1745 = vdwg.mxu0
        %v1746 = vld [vmem:[%s2] sm:$0xff]
        %v1747 = vld [vmem:[%s2 + $0x8] sm:$0xff]
        %v1748 = vld [vmem:[%s2 + $0x10] sm:$0xff]
        %v1749 = vld [vmem:[%s2 + $0x18] sm:$0xff]
        %1751 = vset.pattern.permute.xlu0 0
        %1752 = vperm.xlu0 %1751, %v1746
        %v1753 = vpop.permute.xlu0 %1752
        %1756 = vset.pattern.permute.xlu0 0
        %1757 = vperm.xlu0 %1756, %v1747
        %v1758 = vpop.permute.xlu0 %1757
        %1761 = vset.pattern.permute.xlu0 0
        %1762 = vperm.xlu0 %1761, %v1748
        %v1763 = vpop.permute.xlu0 %1762
        %1766 = vset.pattern.permute.xlu0 0
        %1767 = vperm.xlu0 %1766, %v1749
        %v1768 = vpop.permute.xlu0 %1767
        %v1770 = vmul.f32 %v1675, %v1753
        %v1771 = vmul.f32 %v1677, %v1753
        %v1772 = vmul.f32 %v1728, %v1753
        %v1773 = vmul.f32 %v1730, %v1753
        %v1774 = vmul.f32 %v1679, %v1758
        %v1775 = vmul.f32 %v1681, %v1758
        %v1776 = vmul.f32 %v1732, %v1758
        %v1777 = vmul.f32 %v1734, %v1758
        %v1778 = vmul.f32 %v1685, %v1763
        %v1779 = vmul.f32 %v1687, %v1763
        %v1780 = vmul.f32 %v1738, %v1763
        %v1781 = vmul.f32 %v1740, %v1763
        %v1782 = vmul.f32 %v1689, %v1768
        %v1783 = vmul.f32 %v1691, %v1768
        %v1784 = vmul.f32 %v1742, %v1768
        %v1785 = vmul.f32 %v1744, %v1768
        %v1786 = vld [vmem:[%s3] sm:$0xff]
        %v1787 = vld [vmem:[%s3 + $0x8] sm:$0xff]
        %v1788 = vld [vmem:[%s3 + $0x10] sm:$0xff]
        %v1789 = vld [vmem:[%s3 + $0x18] sm:$0xff]
        %1791 = vset.pattern.permute.xlu0 0
        %1792 = vperm.xlu0 %1791, %v1786
        %v1793 = vpop.permute.xlu0 %1792
        %1796 = vset.pattern.permute.xlu0 0
        %1797 = vperm.xlu0 %1796, %v1787
        %v1798 = vpop.permute.xlu0 %1797
        %1801 = vset.pattern.permute.xlu0 0
        %1802 = vperm.xlu0 %1801, %v1788
        %v1803 = vpop.permute.xlu0 %1802
        %1806 = vset.pattern.permute.xlu0 0
        %1807 = vperm.xlu0 %1806, %v1789
        %v1808 = vpop.permute.xlu0 %1807
        %v1810 = vadd.f32 %v1770, %v1793
        %v1811 = vadd.f32 %v1771, %v1793
        %v1812 = vadd.f32 %v1772, %v1793
        %v1813 = vadd.f32 %v1773, %v1793
        %v1814 = vadd.f32 %v1774, %v1798
        %v1815 = vadd.f32 %v1775, %v1798
        %v1816 = vadd.f32 %v1776, %v1798
        %v1817 = vadd.f32 %v1777, %v1798
        %v1818 = vadd.f32 %v1778, %v1803
        %v1819 = vadd.f32 %v1779, %v1803
        %v1820 = vadd.f32 %v1780, %v1803
        %v1821 = vadd.f32 %v1781, %v1803
        %v1822 = vadd.f32 %v1782, %v1808
        %v1823 = vadd.f32 %v1783, %v1808
        %v1824 = vadd.f32 %v1784, %v1808
        %v1825 = vadd.f32 %v1785, %v1808
        %v1826 = vmax.f32 %v1810, 0.0
        %v1827 = vmax.f32 %v1811, 0.0
        %v1828 = vmax.f32 %v1812, 0.0
        %v1829 = vmax.f32 %v1813, 0.0
        %v1830 = vmax.f32 %v1814, 0.0
        %v1831 = vmax.f32 %v1815, 0.0
        %v1832 = vmax.f32 %v1816, 0.0
        %v1833 = vmax.f32 %v1817, 0.0
        %v1834 = vmax.f32 %v1818, 0.0
        %v1835 = vmax.f32 %v1819, 0.0
        %v1836 = vmax.f32 %v1820, 0.0
        %v1837 = vmax.f32 %v1821, 0.0
        %v1838 = vmax.f32 %v1822, 0.0
        %v1839 = vmax.f32 %v1823, 0.0
        %v1840 = vmax.f32 %v1824, 0.0
        %v1841 = vmax.f32 %v1825, 0.0
        %1842 = vst [vmem:[%s244] sm:$0xff] %v1826
        %1843 = vst [vmem:[%s244 + $0x8] sm:$0xff] %v1827
        %1844 = vst [vmem:[%s244 + $0x10] sm:$0xff] %v1828
        %1845 = vst [vmem:[%s244 + $0x18] sm:$0xff] %v1829
        %1846 = vst [vmem:[%s244 + $0x20] sm:$0xff] %v1830
        %1847 = vst [vmem:[%s244 + $0x28] sm:$0xff] %v1831
        %1848 = vst [vmem:[%s244 + $0x30] sm:$0xff] %v1832
        %1849 = vst [vmem:[%s244 + $0x38] sm:$0xff] %v1833
        %1850 = vst [vmem:[%s244 + $0x40] sm:$0xff] %v1834
        %1851 = vst [vmem:[%s244 + $0x48] sm:$0xff] %v1835
        %1852 = vst [vmem:[%s244 + $0x50] sm:$0xff] %v1836
        %1853 = vst [vmem:[%s244 + $0x58] sm:$0xff] %v1837
        %1854 = vst [vmem:[%s244 + $0x60] sm:$0xff] %v1838
        %1855 = vst [vmem:[%s244 + $0x68] sm:$0xff] %v1839
        %1856 = vst [vmem:[%s244 + $0x70] sm:$0xff] %v1840
        %1857 = vst [vmem:[%s244 + $0x78] sm:$0xff] %v1841
        %s1858 = sand.u32 %s133, 1
        %s1859 = scalar_lea.sflag [#allocation6], %s1858
        %s1860 = sand.u32 %s133, 1
        %s1861 = smul.addr %s1860, 128
        %s1862 = scalar_lea.vmem [#allocation9], %s1861
        // Predicated region
        $region45: #{tpu_custom_call.1} parent=35 // pred_check
          %p1863 = pneg %p143
        $region46: #{tpu_custom_call.1} parent=35 // pred_check_branch
          %1865 = sbr.rel (%p1863) target = $region48
        $region47: #{tpu_custom_call.1} parent=35 // pred_region
          %s1866 = smul.u32 4, %s27
          %s1868 = ssub.s32 2048, 2048
          %1869 = vsyncadd %s1859, %s1868
          %s1870 = smul.addr %s26, 192
          %s1871 = sadd.s32 %s1866, %s1870
          %s1872 = smul.addr %s1871, 128
          %s1873 = scalar_lea.hbm %s4, %s1872
          %s1874 = sshll.u32 %s1862, 4
          %s1875 = int_to_ptr.vmem [resolvable:$true] %s1874
          %1880 = dma.vmem_to_hbm [thread:$0]  %s1875, 2048, %s1873, %s1859, 512, 6144, 32
        $region48: #{tpu_custom_call.1} parent=35 // pred_fallthru
          _
      $region36: #{tpu_custom_call.1} parent=5 // pred_fallthru
        _
      %p1881 = scmp.le.s32.totalorder 2, %s17
      // Predicated region
      $region49: #{tpu_custom_call.1} parent=5 // pred_check
        %p1882 = pneg %p1881
      $region50: #{tpu_custom_call.1} parent=5 // pred_check_branch
        %1884 = sbr.rel (%p1882) target = $region52
      $region51: #{tpu_custom_call.1} parent=5 // pred_region
        %s1885 = ssub.s32 %s17, 2
        // Predicated region
        $region53: #{tpu_custom_call.1} parent=51 // pred_check
          %p1886 = pneg %p149
        $region54: #{tpu_custom_call.1} parent=51 // pred_check_branch
          %1888 = sbr.rel (%p1886) target = $region56
        $region55: #{tpu_custom_call.1} parent=51 // pred_region
          %s1889 = sand.u32 %s134, 1
          %s1890 = scalar_lea.sflag [#allocation6], %s1889
          %s1891 = sand.u32 %s134, 1
          %s1892 = smul.addr %s1891, 128
          %s1893 = scalar_lea.vmem [#allocation9], %s1892
          %1894 = dma.done %s1890, 2048
        $region56: #{tpu_custom_call.1} parent=51 // pred_fallthru
          _
      $region52: #{tpu_custom_call.1} parent=5 // pred_fallthru
        _
    $region6: #{tpu_custom_call.1} parent=1 // loop_footer
      %s21 = sadd.s32 1, %s17
    $region7: #{tpu_custom_call.1} parent=1 // loop_footer_branch
      %16 = sbr.rel target = $region3
    $region8: #{tpu_custom_call.1} parent=1 // loop_exit
      _
    %1895 = vsyncpa [#allocation5], 1
    %s1896 = scalar_lea.sflag [#allocation5], 1
    %1897 = vsyncpa %s1896, 1
    %1898 = vsyncpa [#allocation8], 1
    %1899 = vsyncpa [#allocation6], 1
    %s1900 = scalar_lea.sflag [#allocation6], 1
    %1901 = vsyncpa %s1900, 1

</llo_original>
